<compile_context>
chip_gen: v6e
topology: v6e:2x2x1
jax: 0.10.0
libtpu: 0.0.40
codegen_flags: <defaults>
</compile_context>

<pallas_src>
import jax
import jax.numpy as jnp
from jax.experimental import pallas as pl
from jax.experimental.pallas import tpu as pltpu


# ---------------- fused Pallas kernel ----------------

def _convnet_fused_kernel(xf_ref, w1_ref, b1_ref, w2_ref, b2_ref, w3_ref, b3_ref,
                          fw1_ref, fb1_ref, fw2_ref, fb2_ref, o_ref):
    # xf_ref: (TILE_N, 126) natural flatten of (N, 2, 63); w1 rows are
    # pre-permuted so this directly realizes conv1 (k=3, stride=3).
    h = xf_ref[...]
    # conv1 -> (TILE_N, 105)   column index = p*5 + c
    h = jnp.maximum(
        jnp.dot(h, w1_ref[...], preferred_element_type=jnp.float32) + b1_ref[...], 0.0)
    # conv2 (1x1) -> (TILE_N, 210)   column index = p*10 + c
    h = jnp.maximum(
        jnp.dot(h, w2_ref[...], preferred_element_type=jnp.float32) + b2_ref[...], 0.0)
    # conv3 (1x1) -> (TILE_N, 420)   column index = p*20 + c  (== position-major flatten)
    h = jnp.maximum(
        jnp.dot(h, w3_ref[...], preferred_element_type=jnp.float32) + b3_ref[...], 0.0)
    # fc1 (weights pre-permuted to consume the position-major flatten) -> (TILE_N, 630)
    h = jnp.maximum(
        jnp.dot(h, fw1_ref[...], preferred_element_type=jnp.float32) + fb1_ref[...], 0.0)
    # dropout(p=0.5) -> identity (eval);  fc2 padded to 128 lane-dense columns
    o_ref[...] = (
        jnp.dot(h, fw2_ref[...], preferred_element_type=jnp.float32) + fb2_ref[...])


# ---------------- parameter construction (deterministic, PyTorch shapes) ----------------

def init_params(key):
    ks = jax.random.split(key, 10)

    def u(k, shape, fan_in):
        bound = 1.0 / jnp.sqrt(fan_in)
        return jax.random.uniform(k, shape, jnp.float32, -bound, bound)

    return {
        # PyTorch shapes: Conv1d weight (out, in, k); Linear weight (out, in)
        "conv1_w": u(ks[0], (5, 2, 3), 2 * 3),
        "conv1_b": u(ks[1], (5,), 2 * 3),
        "conv2_w": u(ks[2], (10, 5, 1), 5 * 1),
        "conv2_b": u(ks[3], (10,), 5 * 1),
        "conv3_w": u(ks[4], (20, 10, 1), 10 * 1),
        "conv3_b": u(ks[5], (20,), 10 * 1),
        "fc1_w": u(ks[6], (630, 420), 420),
        "fc1_b": u(ks[7], (630,), 420),
        "fc2_w": u(ks[8], (63, 630), 630),
        "fc2_b": u(ks[9], (63,), 630),
    }


def prepare_params(params):
    """One-time conversion of PyTorch-layout weights into matmul-ready form."""
    eye21 = jnp.eye(21, dtype=jnp.float32)

    # conv1 as a block-diagonal matmul whose ROWS are permuted to consume the
    # natural contiguous flatten of (N, 2, 63): natural column = ci*63 + 3*p + k.
    w1_small = params["conv1_w"].transpose(1, 2, 0).reshape(6, 5)  # row = ci*3+k, col = c
    blockdiag1 = jnp.kron(eye21, w1_small)                         # (126, 105), row = p*6+ci*3+k
    r = jnp.arange(126)
    ci, l = jnp.divmod(r, 63)
    p, k = jnp.divmod(l, 3)
    w1 = blockdiag1[p * 6 + ci * 3 + k]                            # (126, 105), row = ci*63+3p+k

    w2 = params["conv2_w"][:, :, 0].T                              # (5, 10)
    w3 = params["conv3_w"][:, :, 0].T                              # (10, 20)
    return {
        "w1": w1,
        "b1": jnp.tile(params["conv1_b"], 21).reshape(1, 105),
        # block-diagonal conv weights: kron(I_21, w) keeps positions independent
        "w2": jnp.kron(eye21, w2),                                 # (105, 210)
        "b2": jnp.tile(params["conv2_b"], 21).reshape(1, 210),
        "w3": jnp.kron(eye21, w3),                                 # (210, 420)
        "b3": jnp.tile(params["conv3_b"], 21).reshape(1, 420),
        # PyTorch flatten of (N,20,21) indexes c*21+p; our activations are p*20+c,
        # so permute fc1 weight columns accordingly.
        "fw1": params["fc1_w"].reshape(630, 20, 21).transpose(2, 1, 0).reshape(420, 630),
        "fb1": params["fc1_b"].reshape(1, 630),
        # fc2 padded to lane-dense 128 output columns (zeros in the pad)
        "fw2": jnp.pad(params["fc2_w"].T, ((0, 0), (0, 128 - 63))),  # (630, 128)
        "fb2": jnp.pad(params["fc2_b"].reshape(1, 63), ((0, 0), (0, 128 - 63))),
    }


# ---------------- forward wrapper ----------------

def _round_up(v, m):
    return (v + m - 1) // m * m


def convnet_v1_forward(x, prep, *, tile_n=512):
    """x: (N, 2, 63) float32 (NCL, like the PyTorch Conv1d input)."""
    N = x.shape[0]
    assert x.shape[1] == 2 and x.shape[2] == 63

    # Free contiguous flatten; conv1 weight rows already consume this layout.
    xflat = x.reshape(N, 126)

    # batch tiling (pad N up to a multiple of the tile)
    tile_n = min(tile_n, _round_up(N, 8))
    n_pad = _round_up(N, tile_n)
    if n_pad != N:
        xflat = jnp.pad(xflat, ((0, n_pad - N), (0, 0)))
    num_tiles = n_pad // tile_n

    weights = (prep["w1"], prep["b1"], prep["w2"], prep["b2"], prep["w3"], prep["b3"],
               prep["fw1"], prep["fb1"], prep["fw2"], prep["fb2"])

    in_specs = [pl.BlockSpec((tile_n, 126), lambda i: (i, 0))]
    for w in weights:
        # constant index_map -> weights stay VMEM-resident across all grid steps
        in_specs.append(pl.BlockSpec(w.shape, lambda i: (0, 0)))

    flops = 2 * n_pad * (126 * 105 + 105 * 210 + 210 * 420 + 420 * 630 + 630 * 128)
    bytes_accessed = n_pad * (126 + 128) * 4 + sum(int(w.size) * 4 for w in weights)

    out_pad = pl.pallas_call(
        _convnet_fused_kernel,
        grid=(num_tiles,),
        in_specs=in_specs,
        out_specs=pl.BlockSpec((tile_n, 128), lambda i: (i, 0)),
        out_shape=jax.ShapeDtypeStruct((n_pad, 128), jnp.float32),
        compiler_params=pltpu.CompilerParams(
            dimension_semantics=("parallel",)),
        cost_estimate=pl.CostEstimate(
            flops=flops, transcendentals=0, bytes_accessed=bytes_accessed),
    )(xflat, *weights)

    return out_pad[:N, :63]


# ---------------- pure-JAX reference (for a sanity check) ----------------

def _reference_forward(x, params):
    N = x.shape[0]
    xp = x.reshape(N, 2, 21, 3)
    h1 = jax.nn.relu(jnp.einsum("ncpk,ock->nop", xp, params["conv1_w"])
                     + params["conv1_b"][None, :, None])
    h2 = jax.nn.relu(jnp.einsum("ncp,oc->nop", h1, params["conv2_w"][:, :, 0])
                     + params["conv2_b"][None, :, None])
    h3 = jax.nn.relu(jnp.einsum("ncp,oc->nop", h2, params["conv3_w"][:, :, 0])
                     + params["conv3_b"][None, :, None])
    flat = h3.reshape(N, 20 * 21)                      # channel-major, like torch Flatten
    f1 = jax.nn.relu(flat @ params["fc1_w"].T + params["fc1_b"])
    return f1 @ params["fc2_w"].T + params["fc2_b"]    # dropout == identity (eval)


if __name__ == "__main__":
    key = jax.random.PRNGKey(0)
    k_params, k_x = jax.random.split(key)

    params = init_params(k_params)
    prep = prepare_params(params)  # one-time weight preparation (hoisted out of forward)

    # Conv1d(2, 5, 3, stride=3) ... Linear(20*21, ...)  =>  input length 63
    x = jax.random.normal(k_x, (2, 2, 63), dtype=jnp.float32)

    out = convnet_v1_forward(x, prep)
    out = jax.block_until_ready(out)
    assert out.shape == (2, 63) and out.dtype == jnp.float32

    ref = jax.block_until_ready(_reference_forward(x, params))
    assert jnp.allclose(out, ref, atol=2e-2, rtol=2e-2), float(jnp.abs(out - ref).max())

    print("KERNEL_OK")
</pallas_src>

<mosaic_0001>
module attributes {stable_mosaic.version = 11 : i64} {
  func.func @_convnet_fused_kernel(%arg0: i32, %arg1: memref<8x126xf32, #tpu.memory_space<vmem>>, %arg2: memref<126x105xf32, #tpu.memory_space<vmem>>, %arg3: memref<1x105xf32, #tpu.memory_space<vmem>>, %arg4: memref<105x210xf32, #tpu.memory_space<vmem>>, %arg5: memref<1x210xf32, #tpu.memory_space<vmem>>, %arg6: memref<210x420xf32, #tpu.memory_space<vmem>>, %arg7: memref<1x420xf32, #tpu.memory_space<vmem>>, %arg8: memref<420x630xf32, #tpu.memory_space<vmem>>, %arg9: memref<1x630xf32, #tpu.memory_space<vmem>>, %arg10: memref<630x128xf32, #tpu.memory_space<vmem>>, %arg11: memref<1x128xf32, #tpu.memory_space<vmem>>, %arg12: memref<8x128xf32, #tpu.memory_space<vmem>>) attributes {dimension_semantics = [#tpu.dimension_semantics<parallel>], iteration_bounds = array<i64: 1>, scalar_prefetch = 0 : i64, scratch_operands = 0 : i64, tpu.core_type = #tpu.core_type<tc>, window_params = [{transform_indices = @transform_0, window_bounds = array<i64: 8, 126>}, {pipeline_mode = #tpu.pipeline_mode<synchronous>, transform_indices = @transform_1, window_bounds = array<i64: 126, 105>}, {pipeline_mode = #tpu.pipeline_mode<synchronous>, transform_indices = @transform_2, window_bounds = array<i64: 1, 105>}, {pipeline_mode = #tpu.pipeline_mode<synchronous>, transform_indices = @transform_3, window_bounds = array<i64: 105, 210>}, {pipeline_mode = #tpu.pipeline_mode<synchronous>, transform_indices = @transform_4, window_bounds = array<i64: 1, 210>}, {pipeline_mode = #tpu.pipeline_mode<synchronous>, transform_indices = @transform_5, window_bounds = array<i64: 210, 420>}, {pipeline_mode = #tpu.pipeline_mode<synchronous>, transform_indices = @transform_6, window_bounds = array<i64: 1, 420>}, {pipeline_mode = #tpu.pipeline_mode<synchronous>, transform_indices = @transform_7, window_bounds = array<i64: 420, 630>}, {pipeline_mode = #tpu.pipeline_mode<synchronous>, transform_indices = @transform_8, window_bounds = array<i64: 1, 630>}, {pipeline_mode = #tpu.pipeline_mode<synchronous>, transform_indices = @transform_9, window_bounds = array<i64: 630, 128>}, {pipeline_mode = #tpu.pipeline_mode<synchronous>, transform_indices = @transform_10, window_bounds = array<i64: 1, 128>}, {transform_indices = @transform_11, window_bounds = array<i64: 8, 128>}]} {
    %c0 = arith.constant 0 : index
    %c0_0 = arith.constant 0 : index
    %0 = vector.load %arg1[%c0, %c0_0] : memref<8x126xf32, #tpu.memory_space<vmem>>, vector<8x126xf32>
    %c0_1 = arith.constant 0 : index
    %c0_2 = arith.constant 0 : index
    %1 = vector.load %arg2[%c0_1, %c0_2] : memref<126x105xf32, #tpu.memory_space<vmem>>, vector<126x105xf32>
    %cst = arith.constant dense<0.000000e+00> : vector<8x105xf32>
    %2 = tpu.matmul %0, %1, %cst {dimension_numbers = #tpu.dot_dimension_numbers<[1], [0], [0], [1], [0, 0, 1, 1], [], []>} : vector<8x126xf32>, vector<126x105xf32>, vector<8x105xf32> -> vector<8x105xf32>
    %c0_3 = arith.constant 0 : index
    %c0_4 = arith.constant 0 : index
    %3 = vector.load %arg3[%c0_3, %c0_4] : memref<1x105xf32, #tpu.memory_space<vmem>>, vector<1x105xf32>
    %4 = vector.broadcast %3 : vector<1x105xf32> to vector<8x105xf32>
    %5 = arith.addf %2, %4 : vector<8x105xf32>
    %cst_5 = arith.constant 0.000000e+00 : f32
    %6 = vector.broadcast %cst_5 : f32 to vector<8x105xf32>
    %7 = arith.maximumf %5, %6 : vector<8x105xf32>
    %c0_6 = arith.constant 0 : index
    %c0_7 = arith.constant 0 : index
    %8 = vector.load %arg4[%c0_6, %c0_7] : memref<105x210xf32, #tpu.memory_space<vmem>>, vector<105x210xf32>
    %cst_8 = arith.constant dense<0.000000e+00> : vector<8x210xf32>
    %9 = tpu.matmul %7, %8, %cst_8 {dimension_numbers = #tpu.dot_dimension_numbers<[1], [0], [0], [1], [0, 0, 1, 1], [], []>} : vector<8x105xf32>, vector<105x210xf32>, vector<8x210xf32> -> vector<8x210xf32>
    %c0_9 = arith.constant 0 : index
    %c0_10 = arith.constant 0 : index
    %10 = vector.load %arg5[%c0_9, %c0_10] : memref<1x210xf32, #tpu.memory_space<vmem>>, vector<1x210xf32>
    %11 = vector.broadcast %10 : vector<1x210xf32> to vector<8x210xf32>
    %12 = arith.addf %9, %11 : vector<8x210xf32>
    %cst_11 = arith.constant 0.000000e+00 : f32
    %13 = vector.broadcast %cst_11 : f32 to vector<8x210xf32>
    %14 = arith.maximumf %12, %13 : vector<8x210xf32>
    %c0_12 = arith.constant 0 : index
    %c0_13 = arith.constant 0 : index
    %15 = vector.load %arg6[%c0_12, %c0_13] : memref<210x420xf32, #tpu.memory_space<vmem>>, vector<210x420xf32>
    %cst_14 = arith.constant dense<0.000000e+00> : vector<8x420xf32>
    %16 = tpu.matmul %14, %15, %cst_14 {dimension_numbers = #tpu.dot_dimension_numbers<[1], [0], [0], [1], [0, 0, 1, 1], [], []>} : vector<8x210xf32>, vector<210x420xf32>, vector<8x420xf32> -> vector<8x420xf32>
    %c0_15 = arith.constant 0 : index
    %c0_16 = arith.constant 0 : index
    %17 = vector.load %arg7[%c0_15, %c0_16] : memref<1x420xf32, #tpu.memory_space<vmem>>, vector<1x420xf32>
    %18 = vector.broadcast %17 : vector<1x420xf32> to vector<8x420xf32>
    %19 = arith.addf %16, %18 : vector<8x420xf32>
    %cst_17 = arith.constant 0.000000e+00 : f32
    %20 = vector.broadcast %cst_17 : f32 to vector<8x420xf32>
    %21 = arith.maximumf %19, %20 : vector<8x420xf32>
    %c0_18 = arith.constant 0 : index
    %c0_19 = arith.constant 0 : index
    %22 = vector.load %arg8[%c0_18, %c0_19] : memref<420x630xf32, #tpu.memory_space<vmem>>, vector<420x630xf32>
    %cst_20 = arith.constant dense<0.000000e+00> : vector<8x630xf32>
    %23 = tpu.matmul %21, %22, %cst_20 {dimension_numbers = #tpu.dot_dimension_numbers<[1], [0], [0], [1], [0, 0, 1, 1], [], []>} : vector<8x420xf32>, vector<420x630xf32>, vector<8x630xf32> -> vector<8x630xf32>
    %c0_21 = arith.constant 0 : index
    %c0_22 = arith.constant 0 : index
    %24 = vector.load %arg9[%c0_21, %c0_22] : memref<1x630xf32, #tpu.memory_space<vmem>>, vector<1x630xf32>
    %25 = vector.broadcast %24 : vector<1x630xf32> to vector<8x630xf32>
    %26 = arith.addf %23, %25 : vector<8x630xf32>
    %cst_23 = arith.constant 0.000000e+00 : f32
    %27 = vector.broadcast %cst_23 : f32 to vector<8x630xf32>
    %28 = arith.maximumf %26, %27 : vector<8x630xf32>
    %c0_24 = arith.constant 0 : index
    %c0_25 = arith.constant 0 : index
    %29 = vector.load %arg10[%c0_24, %c0_25] : memref<630x128xf32, #tpu.memory_space<vmem>>, vector<630x128xf32>
    %cst_26 = arith.constant dense<0.000000e+00> : vector<8x128xf32>
    %30 = tpu.matmul %28, %29, %cst_26 {dimension_numbers = #tpu.dot_dimension_numbers<[1], [0], [0], [1], [0, 0, 1, 1], [], []>} : vector<8x630xf32>, vector<630x128xf32>, vector<8x128xf32> -> vector<8x128xf32>
    %c0_27 = arith.constant 0 : index
    %c0_28 = arith.constant 0 : index
    %31 = vector.load %arg11[%c0_27, %c0_28] : memref<1x128xf32, #tpu.memory_space<vmem>>, vector<1x128xf32>
    %32 = vector.broadcast %31 : vector<1x128xf32> to vector<8x128xf32>
    %33 = arith.addf %30, %32 : vector<8x128xf32>
    %c0_29 = arith.constant 0 : index
    %c0_30 = arith.constant 0 : index
    %34 = vector.load %arg12[%c0_29, %c0_30] : memref<8x128xf32, #tpu.memory_space<vmem>>, vector<8x128xf32>
    tpu.vector_store %arg12[%c0_29, %c0_30], %33 {strides = array<i32>} : memref<8x128xf32, #tpu.memory_space<vmem>>, vector<8x128xf32>,
    return
  }
  func.func @transform_0(%arg0: i32) -> (i32, i32) {
    %c0_i32 = arith.constant 0 : i32
    %c0_i32_0 = arith.constant 0 : i32
    return %arg0, %c0_i32 : i32, i32
  }
  func.func @transform_1(%arg0: i32) -> (i32, i32) {
    %c0_i32 = arith.constant 0 : i32
    %c0_i32_0 = arith.constant 0 : i32
    %c0_i32_1 = arith.constant 0 : i32
    return %c0_i32, %c0_i32_0 : i32, i32
  }
  func.func @transform_2(%arg0: i32) -> (i32, i32) {
    %c0_i32 = arith.constant 0 : i32
    %c0_i32_0 = arith.constant 0 : i32
    %c0_i32_1 = arith.constant 0 : i32
    return %c0_i32, %c0_i32_0 : i32, i32
  }
  func.func @transform_3(%arg0: i32) -> (i32, i32) {
    %c0_i32 = arith.constant 0 : i32
    %c0_i32_0 = arith.constant 0 : i32
    %c0_i32_1 = arith.constant 0 : i32
    return %c0_i32, %c0_i32_0 : i32, i32
  }
  func.func @transform_4(%arg0: i32) -> (i32, i32) {
    %c0_i32 = arith.constant 0 : i32
    %c0_i32_0 = arith.constant 0 : i32
    %c0_i32_1 = arith.constant 0 : i32
    return %c0_i32, %c0_i32_0 : i32, i32
  }
  func.func @transform_5(%arg0: i32) -> (i32, i32) {
    %c0_i32 = arith.constant 0 : i32
    %c0_i32_0 = arith.constant 0 : i32
    %c0_i32_1 = arith.constant 0 : i32
    return %c0_i32, %c0_i32_0 : i32, i32
  }
  func.func @transform_6(%arg0: i32) -> (i32, i32) {
    %c0_i32 = arith.constant 0 : i32
    %c0_i32_0 = arith.constant 0 : i32
    %c0_i32_1 = arith.constant 0 : i32
    return %c0_i32, %c0_i32_0 : i32, i32
  }
  func.func @transform_7(%arg0: i32) -> (i32, i32) {
    %c0_i32 = arith.constant 0 : i32
    %c0_i32_0 = arith.constant 0 : i32
    %c0_i32_1 = arith.constant 0 : i32
    return %c0_i32, %c0_i32_0 : i32, i32
  }
  func.func @transform_8(%arg0: i32) -> (i32, i32) {
    %c0_i32 = arith.constant 0 : i32
    %c0_i32_0 = arith.constant 0 : i32
    %c0_i32_1 = arith.constant 0 : i32
    return %c0_i32, %c0_i32_0 : i32, i32
  }
  func.func @transform_9(%arg0: i32) -> (i32, i32) {
    %c0_i32 = arith.constant 0 : i32
    %c0_i32_0 = arith.constant 0 : i32
    %c0_i32_1 = arith.constant 0 : i32
    return %c0_i32, %c0_i32_0 : i32, i32
  }
  func.func @transform_10(%arg0: i32) -> (i32, i32) {
    %c0_i32 = arith.constant 0 : i32
    %c0_i32_0 = arith.constant 0 : i32
    %c0_i32_1 = arith.constant 0 : i32
    return %c0_i32, %c0_i32_0 : i32, i32
  }
  func.func @transform_11(%arg0: i32) -> (i32, i32) {
    %c0_i32 = arith.constant 0 : i32
    %c0_i32_0 = arith.constant 0 : i32
    return %arg0, %c0_i32 : i32, i32
  }
}

</mosaic_0001>

<llo_original>
// kernel: tpu_custom_call.1
$region0: #{tpu_custom_call.1}
  #allocation0 [shape = 'u32[]', space=smem, size = 0x4, offset = 0x4, fixed_abs, tag = 'smem constant byte address 0x4 - core index']
  #allocation1 [shape = 'u32[144,128]{1,0:T(1,128)}', space=vmem, size = 0x12000, scoped, tag = 'internal scratch']
  %s0 = inlined_call_operand.vmem [shape: f32[8,126], index: 0, kind: input, shape index: {}]
  %s1 = inlined_call_operand.vmem [shape: f32[126,105], index: 1, kind: input, shape index: {}]
  %s2 = inlined_call_operand.vmem [shape: f32[1,105], index: 2, kind: input, shape index: {}]
  %s3 = inlined_call_operand.vmem [shape: f32[105,210], index: 3, kind: input, shape index: {}]
  %s4 = inlined_call_operand.vmem [shape: f32[1,210], index: 4, kind: input, shape index: {}]
  %s5 = inlined_call_operand.vmem [shape: f32[210,420], index: 5, kind: input, shape index: {}]
  %s6 = inlined_call_operand.vmem [shape: f32[1,420], index: 6, kind: input, shape index: {}]
  %s7 = inlined_call_operand.vmem [shape: f32[420,630], index: 7, kind: input, shape index: {}]
  %s8 = inlined_call_operand.vmem [shape: f32[1,630], index: 8, kind: input, shape index: {}]
  %s9 = inlined_call_operand.hbm [shape: f32[630,128], index: 9, kind: input, shape index: {}]
  %s10 = inlined_call_operand.vmem [shape: f32[1,128], index: 10, kind: input, shape index: {}]
  %s11 = inlined_call_operand.hbm [shape: f32[8,128], index: 11, kind: output, shape index: {}]
  %s12 = sld [smem:[#allocation0]]
  $region58: #{tpu_custom_call.1} parent=0
    _
  %s14 = ssub.s32 1, %s12
  %s15 = scalar_select 0, %s14, %s12
  $region1: #{tpu_custom_call.1} parent=0
    #allocation2 [shape = 'u8[323584]{0}', space=vmem, size = 0x4f000, scoped, tag = 'input window, operand 9, single buffered']
    #allocation3 [shape = 's32[1]{0}', space=sflag, size = 0x4, scoped, tag = 'scoped memory for tpu_custom_call.1']
    #allocation4 [shape = 's32[1]{0}', space=sflag, size = 0x4, scoped, tag = 'scoped memory for tpu_custom_call.1']
    #allocation5 [shape = 'u8[4096]{0}', space=vmem, size = 0x1000, scoped, tag = 'output window, operand 0, single buffered']
    %16 = vsyncpa [#allocation3], 0
    %17 = vsyncpa [#allocation4], 0
    // Predicated region
    $region2: #{tpu_custom_call.1} parent=1 // pred_check
      _
    $region3: #{tpu_custom_call.1} parent=1 // pred_check_branch
      %19 = sbr.rel (0) target = $region5
    $region4: #{tpu_custom_call.1} parent=1 // pred_region
      _
    $region5: #{tpu_custom_call.1} parent=1 // pred_fallthru
      _
    // Predicated region
    $region6: #{tpu_custom_call.1} parent=1 // pred_check
      _
    $region7: #{tpu_custom_call.1} parent=1 // pred_check_branch
      %21 = sbr.rel (0) target = $region9
    $region8: #{tpu_custom_call.1} parent=1 // pred_region
      _
    $region9: #{tpu_custom_call.1} parent=1 // pred_fallthru
      _
    // Predicated region
    $region10: #{tpu_custom_call.1} parent=1 // pred_check
      _
    $region11: #{tpu_custom_call.1} parent=1 // pred_check_branch
      %23 = sbr.rel (0) target = $region13
    $region12: #{tpu_custom_call.1} parent=1 // pred_region
      _
    $region13: #{tpu_custom_call.1} parent=1 // pred_fallthru
      _
    // Predicated region
    $region14: #{tpu_custom_call.1} parent=1 // pred_check
      _
    $region15: #{tpu_custom_call.1} parent=1 // pred_check_branch
      %25 = sbr.rel (0) target = $region17
    $region16: #{tpu_custom_call.1} parent=1 // pred_region
      _
    $region17: #{tpu_custom_call.1} parent=1 // pred_fallthru
      _
    // Predicated region
    $region18: #{tpu_custom_call.1} parent=1 // pred_check
      _
    $region19: #{tpu_custom_call.1} parent=1 // pred_check_branch
      %27 = sbr.rel (0) target = $region21
    $region20: #{tpu_custom_call.1} parent=1 // pred_region
      _
    $region21: #{tpu_custom_call.1} parent=1 // pred_fallthru
      _
    // Predicated region
    $region22: #{tpu_custom_call.1} parent=1 // pred_check
      _
    $region23: #{tpu_custom_call.1} parent=1 // pred_check_branch
      %29 = sbr.rel (0) target = $region25
    $region24: #{tpu_custom_call.1} parent=1 // pred_region
      _
    $region25: #{tpu_custom_call.1} parent=1 // pred_fallthru
      _
    // Predicated region
    $region26: #{tpu_custom_call.1} parent=1 // pred_check
      _
    $region27: #{tpu_custom_call.1} parent=1 // pred_check_branch
      %31 = sbr.rel (0) target = $region29
    $region28: #{tpu_custom_call.1} parent=1 // pred_region
      _
    $region29: #{tpu_custom_call.1} parent=1 // pred_fallthru
      _
    // Predicated region
    $region30: #{tpu_custom_call.1} parent=1 // pred_check
      _
    $region31: #{tpu_custom_call.1} parent=1 // pred_check_branch
      %33 = sbr.rel (0) target = $region33
    $region32: #{tpu_custom_call.1} parent=1 // pred_region
      _
    $region33: #{tpu_custom_call.1} parent=1 // pred_fallthru
      _
    // Predicated region
    $region34: #{tpu_custom_call.1} parent=1 // pred_check
      _
    $region35: #{tpu_custom_call.1} parent=1 // pred_check_branch
      %35 = sbr.rel (0) target = $region37
    $region36: #{tpu_custom_call.1} parent=1 // pred_region
      _
    $region37: #{tpu_custom_call.1} parent=1 // pred_fallthru
      _
    // Predicated region
    $region38: #{tpu_custom_call.1} parent=1 // pred_check
      _
    $region39: #{tpu_custom_call.1} parent=1 // pred_check_branch
      %37 = sbr.rel (0) target = $region41
    $region40: #{tpu_custom_call.1} parent=1 // pred_region
      %s39 = ssub.s32 10112, 10112
      %40 = vsyncadd [#allocation3], %s39
      %s41 = sshll.u32 [#allocation2], 4
      %s42 = int_to_ptr.vmem [resolvable:$true] %s41
      %47 = dma.hbm_to_vmem [thread:$0]  %s9, 10112, %s42, [#allocation3], 128, 128, 8
    $region41: #{tpu_custom_call.1} parent=1 // pred_fallthru
      _
    // Predicated region
    $region42: #{tpu_custom_call.1} parent=1 // pred_check
      _
    $region43: #{tpu_custom_call.1} parent=1 // pred_check_branch
      %49 = sbr.rel (0) target = $region45
    $region44: #{tpu_custom_call.1} parent=1 // pred_region
      _
    $region45: #{tpu_custom_call.1} parent=1 // pred_fallthru
      _
    // Predicated region
    $region46: #{tpu_custom_call.1} parent=1 // pred_check
      _
    $region47: #{tpu_custom_call.1} parent=1 // pred_check_branch
      %51 = sbr.rel (0) target = $region49
    $region48: #{tpu_custom_call.1} parent=1 // pred_region
      %52 = dma.done [#allocation3], 10112
    $region49: #{tpu_custom_call.1} parent=1 // pred_fallthru
      _
    %v53 = vld [vmem:[%s0] sm:$0xff]
    %v54 = vld [vmem:[%s1] sm:$0xff]
    %v55 = vld [vmem:[%s1 + $0x8] sm:$0xff]
    %v56 = vld [vmem:[%s1 + $0x10] sm:$0xff]
    %v57 = vld [vmem:[%s1 + $0x18] sm:$0xff]
    %v58 = vld [vmem:[%s1 + $0x20] sm:$0xff]
    %v59 = vld [vmem:[%s1 + $0x28] sm:$0xff]
    %v60 = vld [vmem:[%s1 + $0x30] sm:$0xff]
    %v61 = vld [vmem:[%s1 + $0x38] sm:$0xff]
    %v62 = vld [vmem:[%s1 + $0x40] sm:$0xff]
    %v63 = vld [vmem:[%s1 + $0x48] sm:$0xff]
    %v64 = vld [vmem:[%s1 + $0x50] sm:$0xff]
    %v65 = vld [vmem:[%s1 + $0x58] sm:$0xff]
    %v66 = vld [vmem:[%s1 + $0x60] sm:$0xff]
    %v67 = vld [vmem:[%s1 + $0x68] sm:$0xff]
    %v68 = vld [vmem:[%s1 + $0x70] sm:$0xff]
    %v69 = vld [vmem:[%s1 + $0x78] sm:$0x3f]
    %v70 = vld [vmem:[%s2] sm:$0x1]
    %v72 = vlaneseq
    %v73 = vshrl.u32 %v72, 7
    %v74 = vsub.s32 0, %v73
    %v75 = vrot.slane %v70, %v74
    %vm77 = vcmask 1031168
    %v79 = vsel %vm77, %v53, 0
    %vm81 = vcmask 1045504
    %v83 = vsel %vm81, %v69, 0
    %85 = vmatprep.subr.mxu0 0.0
    %86 = vmatpush1.msra.mxu0 %v83
    %87 = vmatprep.subr.mxu0 0.0
    %88 = vmatpush1.msra.mxu0 %v68
    %89 = vmatprep.subr.mxu0 0.0
    %90 = vmatpush1.msra.mxu0 %v67
    %91 = vmatprep.subr.mxu0 0.0
    %92 = vmatpush1.msra.mxu0 %v66
    %93 = vmatprep.subr.mxu0 0.0
    %94 = vmatpush1.msra.mxu0 %v65
    %95 = vmatprep.subr.mxu0 0.0
    %96 = vmatpush1.msra.mxu0 %v64
    %97 = vmatprep.subr.mxu0 0.0
    %98 = vmatpush1.msra.mxu0 %v63
    %99 = vmatprep.subr.mxu0 0.0
    %100 = vmatpush1.msra.mxu0 %v62
    %101 = vmatprep.subr.mxu0 0.0
    %102 = vmatpush1.msra.mxu0 %v61
    %103 = vmatprep.subr.mxu0 0.0
    %104 = vmatpush1.msra.mxu0 %v60
    %105 = vmatprep.subr.mxu0 0.0
    %106 = vmatpush1.msra.mxu0 %v59
    %107 = vmatprep.subr.mxu0 0.0
    %108 = vmatpush1.msra.mxu0 %v58
    %109 = vmatprep.subr.mxu0 0.0
    %110 = vmatpush1.msra.mxu0 %v57
    %111 = vmatprep.subr.mxu0 0.0
    %112 = vmatpush1.msra.mxu0 %v56
    %113 = vmatprep.subr.mxu0 0.0
    %114 = vmatpush1.msra.mxu0 %v55
    %115 = vmatprep.subr.mxu0 0.0
    %116 = vmatpush1.msra.mxu0 %v54
    %117 = vmatprep.subr.mxu0 0.0
    %118 = vmatpush2.msra.mxu0 0.0
    %119 = vmatprep.subr.mxu0 0.0
    %120 = vmatpush2.msra.mxu0 0.0
    %121 = vmatprep.subr.mxu0 0.0
    %122 = vmatpush2.msra.mxu0 0.0
    %123 = vmatprep.subr.mxu0 0.0
    %124 = vmatpush2.msra.mxu0 0.0
    %125 = vmatprep.subr.mxu0 0.0
    %126 = vmatpush2.msra.mxu0 0.0
    %127 = vmatprep.subr.mxu0 0.0
    %128 = vmatpush2.msra.mxu0 0.0
    %129 = vmatprep.subr.mxu0 0.0
    %130 = vmatpush2.msra.mxu0 0.0
    %131 = vmatprep.subr.mxu0 0.0
    %132 = vmatpush2.msra.mxu0 0.0
    %133 = vmatprep.subr.mxu0 0.0
    %134 = vmatpush2.msra.mxu0 0.0
    %135 = vmatprep.subr.mxu0 0.0
    %136 = vmatpush2.msra.mxu0 0.0
    %137 = vmatprep.subr.mxu0 0.0
    %138 = vmatpush2.msra.mxu0 0.0
    %139 = vmatprep.subr.mxu0 0.0
    %140 = vmatpush2.msra.mxu0 0.0
    %141 = vmatprep.subr.mxu0 0.0
    %142 = vmatpush2.msra.mxu0 0.0
    %143 = vmatprep.subr.mxu0 0.0
    %144 = vmatpush2.msra.mxu0 0.0
    %145 = vmatprep.subr.mxu0 0.0
    %146 = vmatpush2.msra.mxu0 0.0
    %147 = vmatprep.subr.mxu0 0.0
    %148 = vmatpush2.msra.mxu0 0.0
    %149 = vmatprep.mubr.f32.mxu0 0.0
    %150 = vmatmul.mubr.f32.gmra.mxu0 %v79
    %v151 = vpop.f32.mrf.mxu0
    %v152 = vadd.f32 %v75, %v151
    %v153 = vpop.f32.mrf.mxu0
    %154 = vdwg.mxu0
    %v155 = vmax.f32 %v152, 0.0
    %v156 = vld [vmem:[%s3] sm:$0xff]
    %v157 = vld [vmem:[%s3 + $0x8] sm:$0xff]
    %v158 = vld [vmem:[%s3 + $0x10] sm:$0xff]
    %v159 = vld [vmem:[%s3 + $0x18] sm:$0xff]
    %v160 = vld [vmem:[%s3 + $0x20] sm:$0xff]
    %v161 = vld [vmem:[%s3 + $0x28] sm:$0xff]
    %v162 = vld [vmem:[%s3 + $0x30] sm:$0xff]
    %v163 = vld [vmem:[%s3 + $0x38] sm:$0xff]
    %v164 = vld [vmem:[%s3 + $0x40] sm:$0xff]
    %v165 = vld [vmem:[%s3 + $0x48] sm:$0xff]
    %v166 = vld [vmem:[%s3 + $0x50] sm:$0xff]
    %v167 = vld [vmem:[%s3 + $0x58] sm:$0xff]
    %v168 = vld [vmem:[%s3 + $0x60] sm:$0xff]
    %v169 = vld [vmem:[%s3 + $0x68] sm:$0xff]
    %v170 = vld [vmem:[%s3 + $0x70] sm:$0xff]
    %v171 = vld [vmem:[%s3 + $0x78] sm:$0xff]
    %v172 = vld [vmem:[%s3 + $0x80] sm:$0xff]
    %v173 = vld [vmem:[%s3 + $0x88] sm:$0xff]
    %v174 = vld [vmem:[%s3 + $0x90] sm:$0xff]
    %v175 = vld [vmem:[%s3 + $0x98] sm:$0xff]
    %v176 = vld [vmem:[%s3 + $0xa0] sm:$0xff]
    %v177 = vld [vmem:[%s3 + $0xa8] sm:$0xff]
    %v178 = vld [vmem:[%s3 + $0xb0] sm:$0xff]
    %v179 = vld [vmem:[%s3 + $0xb8] sm:$0xff]
    %v180 = vld [vmem:[%s3 + $0xc0] sm:$0xff]
    %v181 = vld [vmem:[%s3 + $0xc8] sm:$0xff]
    %v182 = vld [vmem:[%s3 + $0xd0] sm:$0x1]
    %v183 = vld [vmem:[%s3 + $0xd8] sm:$0x1]
    %v184 = vld [vmem:[%s4] sm:$0x3]
    %v186 = vlaneseq
    %v187 = vshrl.u32 %v186, 7
    %v188 = vsub.s32 0, %v187
    %v189 = vrot.slane %v184, %v188
    %v190 = vlaneseq
    %v191 = vshrl.u32 %v190, 7
    %v192 = vsub.s32 1, %v191
    %v193 = vrot.slane %v184, %v192
    %vm196 = vcmask 859136
    %v198 = vsel %vm196, %v155, 0
    %vm200 = vcmask 1040384
    %v202 = vsel %vm200, %v182, 0
    %v205 = vsel %vm200, %v183, 0
    %207 = vmatprep.subr.mxu0 0.0
    %208 = vmatpush1.msra.mxu0 0.0
    %209 = vmatprep.subr.mxu0 0.0
    %210 = vmatpush1.msra.mxu0 0.0
    %211 = vmatprep.subr.mxu0 %v205
    %212 = vmatpush1.msra.mxu0 %v202
    %213 = vmatprep.subr.mxu0 %v181
    %214 = vmatpush1.msra.mxu0 %v180
    %215 = vmatprep.subr.mxu0 %v179
    %216 = vmatpush1.msra.mxu0 %v178
    %217 = vmatprep.subr.mxu0 %v177
    %218 = vmatpush1.msra.mxu0 %v176
    %219 = vmatprep.subr.mxu0 %v175
    %220 = vmatpush1.msra.mxu0 %v174
    %221 = vmatprep.subr.mxu0 %v173
    %222 = vmatpush1.msra.mxu0 %v172
    %223 = vmatprep.subr.mxu0 %v171
    %224 = vmatpush1.msra.mxu0 %v170
    %225 = vmatprep.subr.mxu0 %v169
    %226 = vmatpush1.msra.mxu0 %v168
    %227 = vmatprep.subr.mxu0 %v167
    %228 = vmatpush1.msra.mxu0 %v166
    %229 = vmatprep.subr.mxu0 %v165
    %230 = vmatpush1.msra.mxu0 %v164
    %231 = vmatprep.subr.mxu0 %v163
    %232 = vmatpush1.msra.mxu0 %v162
    %233 = vmatprep.subr.mxu0 %v161
    %234 = vmatpush1.msra.mxu0 %v160
    %235 = vmatprep.subr.mxu0 %v159
    %236 = vmatpush1.msra.mxu0 %v158
    %237 = vmatprep.subr.mxu0 %v157
    %238 = vmatpush1.msra.mxu0 %v156
    %239 = vmatprep.subr.mxu0 0.0
    %240 = vmatpush2.msra.mxu0 0.0
    %241 = vmatprep.subr.mxu0 0.0
    %242 = vmatpush2.msra.mxu0 0.0
    %243 = vmatprep.subr.mxu0 0.0
    %244 = vmatpush2.msra.mxu0 0.0
    %245 = vmatprep.subr.mxu0 0.0
    %246 = vmatpush2.msra.mxu0 0.0
    %247 = vmatprep.subr.mxu0 0.0
    %248 = vmatpush2.msra.mxu0 0.0
    %249 = vmatprep.subr.mxu0 0.0
    %250 = vmatpush2.msra.mxu0 0.0
    %251 = vmatprep.subr.mxu0 0.0
    %252 = vmatpush2.msra.mxu0 0.0
    %253 = vmatprep.subr.mxu0 0.0
    %254 = vmatpush2.msra.mxu0 0.0
    %255 = vmatprep.subr.mxu0 0.0
    %256 = vmatpush2.msra.mxu0 0.0
    %257 = vmatprep.subr.mxu0 0.0
    %258 = vmatpush2.msra.mxu0 0.0
    %259 = vmatprep.subr.mxu0 0.0
    %260 = vmatpush2.msra.mxu0 0.0
    %261 = vmatprep.subr.mxu0 0.0
    %262 = vmatpush2.msra.mxu0 0.0
    %263 = vmatprep.subr.mxu0 0.0
    %264 = vmatpush2.msra.mxu0 0.0
    %265 = vmatprep.subr.mxu0 0.0
    %266 = vmatpush2.msra.mxu0 0.0
    %267 = vmatprep.subr.mxu0 0.0
    %268 = vmatpush2.msra.mxu0 0.0
    %269 = vmatprep.subr.mxu0 0.0
    %270 = vmatpush2.msra.mxu0 0.0
    %271 = vmatprep.mubr.f32.mxu0 0.0
    %272 = vmatmul.mubr.f32.gmra.mxu0 %v198
    %v273 = vpop.f32.mrf.mxu0
    %v274 = vadd.f32 %v189, %v273
    %v275 = vpop.f32.mrf.mxu0
    %v276 = vadd.f32 %v193, %v275
    %277 = vdwg.mxu0
    %v278 = vmax.f32 %v274, 0.0
    %v279 = vmax.f32 %v276, 0.0
    %v280 = vld [vmem:[%s5] sm:$0xff]
    %v281 = vld [vmem:[%s5 + $0x8] sm:$0xff]
    %v282 = vld [vmem:[%s5 + $0x10] sm:$0xff]
    %v283 = vld [vmem:[%s5 + $0x18] sm:$0xff]
    %v284 = vld [vmem:[%s5 + $0x20] sm:$0xff]
    %v285 = vld [vmem:[%s5 + $0x28] sm:$0xff]
    %v286 = vld [vmem:[%s5 + $0x30] sm:$0xff]
    %v287 = vld [vmem:[%s5 + $0x38] sm:$0xff]
    %v288 = vld [vmem:[%s5 + $0x40] sm:$0xff]
    %v289 = vld [vmem:[%s5 + $0x48] sm:$0xff]
    %v290 = vld [vmem:[%s5 + $0x50] sm:$0xff]
    %v291 = vld [vmem:[%s5 + $0x58] sm:$0xff]
    %v292 = vld [vmem:[%s5 + $0x60] sm:$0xff]
    %v293 = vld [vmem:[%s5 + $0x68] sm:$0xff]
    %v294 = vld [vmem:[%s5 + $0x70] sm:$0xff]
    %v295 = vld [vmem:[%s5 + $0x78] sm:$0xff]
    %v296 = vld [vmem:[%s5 + $0x80] sm:$0xff]
    %v297 = vld [vmem:[%s5 + $0x88] sm:$0xff]
    %v298 = vld [vmem:[%s5 + $0x90] sm:$0xff]
    %v299 = vld [vmem:[%s5 + $0x98] sm:$0xff]
    %v300 = vld [vmem:[%s5 + $0xa0] sm:$0xff]
    %v301 = vld [vmem:[%s5 + $0xa8] sm:$0xff]
    %v302 = vld [vmem:[%s5 + $0xb0] sm:$0xff]
    %v303 = vld [vmem:[%s5 + $0xb8] sm:$0xff]
    %v304 = vld [vmem:[%s5 + $0xc0] sm:$0xff]
    %v305 = vld [vmem:[%s5 + $0xc8] sm:$0xff]
    %v306 = vld [vmem:[%s5 + $0xd0] sm:$0xff]
    %v307 = vld [vmem:[%s5 + $0xd8] sm:$0xff]
    %v308 = vld [vmem:[%s5 + $0xe0] sm:$0xff]
    %v309 = vld [vmem:[%s5 + $0xe8] sm:$0xff]
    %v310 = vld [vmem:[%s5 + $0xf0] sm:$0xff]
    %v311 = vld [vmem:[%s5 + $0xf8] sm:$0xff]
    %v312 = vld [vmem:[%s5 + $0x100] sm:$0xff]
    %v313 = vld [vmem:[%s5 + $0x108] sm:$0xff]
    %v314 = vld [vmem:[%s5 + $0x110] sm:$0xff]
    %v315 = vld [vmem:[%s5 + $0x118] sm:$0xff]
    %v316 = vld [vmem:[%s5 + $0x120] sm:$0xff]
    %v317 = vld [vmem:[%s5 + $0x128] sm:$0xff]
    %v318 = vld [vmem:[%s5 + $0x130] sm:$0xff]
    %v319 = vld [vmem:[%s5 + $0x138] sm:$0xff]
    %v320 = vld [vmem:[%s5 + $0x140] sm:$0xff]
    %v321 = vld [vmem:[%s5 + $0x148] sm:$0xff]
    %v322 = vld [vmem:[%s5 + $0x150] sm:$0xff]
    %v323 = vld [vmem:[%s5 + $0x158] sm:$0xff]
    %v324 = vld [vmem:[%s5 + $0x160] sm:$0xff]
    %v325 = vld [vmem:[%s5 + $0x168] sm:$0xff]
    %v326 = vld [vmem:[%s5 + $0x170] sm:$0xff]
    %v327 = vld [vmem:[%s5 + $0x178] sm:$0xff]
    %v328 = vld [vmem:[%s5 + $0x180] sm:$0xff]
    %v329 = vld [vmem:[%s5 + $0x188] sm:$0xff]
    %v330 = vld [vmem:[%s5 + $0x190] sm:$0xff]
    %v331 = vld [vmem:[%s5 + $0x198] sm:$0xff]
    %v332 = vld [vmem:[%s5 + $0x1a0] sm:$0xff]
    %v333 = vld [vmem:[%s5 + $0x1a8] sm:$0xff]
    %v334 = vld [vmem:[%s5 + $0x1b0] sm:$0xff]
    %v335 = vld [vmem:[%s5 + $0x1b8] sm:$0xff]
    %v336 = vld [vmem:[%s5 + $0x1c0] sm:$0xff]
    %v337 = vld [vmem:[%s5 + $0x1c8] sm:$0xff]
    %v338 = vld [vmem:[%s5 + $0x1d0] sm:$0xff]
    %v339 = vld [vmem:[%s5 + $0x1d8] sm:$0xff]
    %v340 = vld [vmem:[%s5 + $0x1e0] sm:$0xff]
    %v341 = vld [vmem:[%s5 + $0x1e8] sm:$0xff]
    %v342 = vld [vmem:[%s5 + $0x1f0] sm:$0xff]
    %v343 = vld [vmem:[%s5 + $0x1f8] sm:$0xff]
    %v344 = vld [vmem:[%s5 + $0x200] sm:$0xff]
    %v345 = vld [vmem:[%s5 + $0x208] sm:$0xff]
    %v346 = vld [vmem:[%s5 + $0x210] sm:$0xff]
    %v347 = vld [vmem:[%s5 + $0x218] sm:$0xff]
    %v348 = vld [vmem:[%s5 + $0x220] sm:$0xff]
    %v349 = vld [vmem:[%s5 + $0x228] sm:$0xff]
    %v350 = vld [vmem:[%s5 + $0x230] sm:$0xff]
    %v351 = vld [vmem:[%s5 + $0x238] sm:$0xff]
    %v352 = vld [vmem:[%s5 + $0x240] sm:$0xff]
    %v353 = vld [vmem:[%s5 + $0x248] sm:$0xff]
    %v354 = vld [vmem:[%s5 + $0x250] sm:$0xff]
    %v355 = vld [vmem:[%s5 + $0x258] sm:$0xff]
    %v356 = vld [vmem:[%s5 + $0x260] sm:$0xff]
    %v357 = vld [vmem:[%s5 + $0x268] sm:$0xff]
    %v358 = vld [vmem:[%s5 + $0x270] sm:$0xff]
    %v359 = vld [vmem:[%s5 + $0x278] sm:$0xff]
    %v360 = vld [vmem:[%s5 + $0x280] sm:$0xff]
    %v361 = vld [vmem:[%s5 + $0x288] sm:$0xff]
    %v362 = vld [vmem:[%s5 + $0x290] sm:$0xff]
    %v363 = vld [vmem:[%s5 + $0x298] sm:$0xff]
    %v364 = vld [vmem:[%s5 + $0x2a0] sm:$0xff]
    %v365 = vld [vmem:[%s5 + $0x2a8] sm:$0xff]
    %v366 = vld [vmem:[%s5 + $0x2b0] sm:$0xff]
    %v367 = vld [vmem:[%s5 + $0x2b8] sm:$0xff]
    %v368 = vld [vmem:[%s5 + $0x2c0] sm:$0xff]
    %v369 = vld [vmem:[%s5 + $0x2c8] sm:$0xff]
    %v370 = vld [vmem:[%s5 + $0x2d0] sm:$0xff]
    %v371 = vld [vmem:[%s5 + $0x2d8] sm:$0xff]
    %v372 = vld [vmem:[%s5 + $0x2e0] sm:$0xff]
    %v373 = vld [vmem:[%s5 + $0x2e8] sm:$0xff]
    %v374 = vld [vmem:[%s5 + $0x2f0] sm:$0xff]
    %v375 = vld [vmem:[%s5 + $0x2f8] sm:$0xff]
    %v376 = vld [vmem:[%s5 + $0x300] sm:$0xff]
    %v377 = vld [vmem:[%s5 + $0x308] sm:$0xff]
    %v378 = vld [vmem:[%s5 + $0x310] sm:$0xff]
    %v379 = vld [vmem:[%s5 + $0x318] sm:$0xff]
    %v380 = vld [vmem:[%s5 + $0x320] sm:$0xff]
    %v381 = vld [vmem:[%s5 + $0x328] sm:$0xff]
    %v382 = vld [vmem:[%s5 + $0x330] sm:$0xff]
    %v383 = vld [vmem:[%s5 + $0x338] sm:$0xff]
    %v384 = vld [vmem:[%s5 + $0x340] sm:$0x3]
    %v385 = vld [vmem:[%s5 + $0x348] sm:$0x3]
    %v386 = vld [vmem:[%s5 + $0x350] sm:$0x3]
    %v387 = vld [vmem:[%s5 + $0x358] sm:$0x3]
    %v388 = vld [vmem:[%s6] sm:$0xf]
    %v390 = vlaneseq
    %v391 = vshrl.u32 %v390, 7
    %v392 = vsub.s32 0, %v391
    %v393 = vrot.slane %v388, %v392
    %v394 = vlaneseq
    %v395 = vshrl.u32 %v394, 7
    %v396 = vsub.s32 1, %v395
    %v397 = vrot.slane %v388, %v396
    %v398 = vlaneseq
    %v399 = vshrl.u32 %v398, 7
    %v400 = vsub.s32 2, %v399
    %v401 = vrot.slane %v388, %v400
    %v402 = vlaneseq
    %v403 = vshrl.u32 %v402, 7
    %v404 = vsub.s32 3, %v403
    %v405 = vrot.slane %v388, %v404
    %vm410 = vcmask 670720
    %v412 = vsel %vm410, %v279, 0
    %vm414 = vcmask 1041408
    %v416 = vsel %vm414, %v384, 0
    %v419 = vsel %vm414, %v385, 0
    %v422 = vsel %vm414, %v386, 0
    %v425 = vsel %vm414, %v387, 0
    %427 = vmatprep.subr.mxu0 %v341
    %428 = vmatpush1.msra.mxu0 %v340
    %429 = vmatprep.subr.mxu0 %v337
    %430 = vmatpush1.msra.mxu0 %v336
    %431 = vmatprep.subr.mxu0 %v333
    %432 = vmatpush1.msra.mxu0 %v332
    %433 = vmatprep.subr.mxu0 %v329
    %434 = vmatpush1.msra.mxu0 %v328
    %435 = vmatprep.subr.mxu0 %v325
    %436 = vmatpush1.msra.mxu0 %v324
    %437 = vmatprep.subr.mxu0 %v321
    %438 = vmatpush1.msra.mxu0 %v320
    %439 = vmatprep.subr.mxu0 %v317
    %440 = vmatpush1.msra.mxu0 %v316
    %441 = vmatprep.subr.mxu0 %v313
    %442 = vmatpush1.msra.mxu0 %v312
    %443 = vmatprep.subr.mxu0 %v309
    %444 = vmatpush1.msra.mxu0 %v308
    %445 = vmatprep.subr.mxu0 %v305
    %446 = vmatpush1.msra.mxu0 %v304
    %447 = vmatprep.subr.mxu0 %v301
    %448 = vmatpush1.msra.mxu0 %v300
    %449 = vmatprep.subr.mxu0 %v297
    %450 = vmatpush1.msra.mxu0 %v296
    %451 = vmatprep.subr.mxu0 %v293
    %452 = vmatpush1.msra.mxu0 %v292
    %453 = vmatprep.subr.mxu0 %v289
    %454 = vmatpush1.msra.mxu0 %v288
    %455 = vmatprep.subr.mxu0 %v285
    %456 = vmatpush1.msra.mxu0 %v284
    %457 = vmatprep.subr.mxu0 %v281
    %458 = vmatpush1.msra.mxu0 %v280
    %459 = vmatprep.subr.mxu0 0.0
    %460 = vmatpush2.msra.mxu0 0.0
    %461 = vmatprep.subr.mxu0 0.0
    %462 = vmatpush2.msra.mxu0 0.0
    %463 = vmatprep.subr.mxu0 0.0
    %464 = vmatpush2.msra.mxu0 0.0
    %465 = vmatprep.subr.mxu0 0.0
    %466 = vmatpush2.msra.mxu0 0.0
    %467 = vmatprep.subr.mxu0 0.0
    %468 = vmatpush2.msra.mxu0 0.0
    %469 = vmatprep.subr.mxu0 %v419
    %470 = vmatpush2.msra.mxu0 %v416
    %471 = vmatprep.subr.mxu0 %v381
    %472 = vmatpush2.msra.mxu0 %v380
    %473 = vmatprep.subr.mxu0 %v377
    %474 = vmatpush2.msra.mxu0 %v376
    %475 = vmatprep.subr.mxu0 %v373
    %476 = vmatpush2.msra.mxu0 %v372
    %477 = vmatprep.subr.mxu0 %v369
    %478 = vmatpush2.msra.mxu0 %v368
    %479 = vmatprep.subr.mxu0 %v365
    %480 = vmatpush2.msra.mxu0 %v364
    %481 = vmatprep.subr.mxu0 %v361
    %482 = vmatpush2.msra.mxu0 %v360
    %483 = vmatprep.subr.mxu0 %v357
    %484 = vmatpush2.msra.mxu0 %v356
    %485 = vmatprep.subr.mxu0 %v353
    %486 = vmatpush2.msra.mxu0 %v352
    %487 = vmatprep.subr.mxu0 %v349
    %488 = vmatpush2.msra.mxu0 %v348
    %489 = vmatprep.subr.mxu0 %v345
    %490 = vmatpush2.msra.mxu0 %v344
    %491 = vmatprep.mubr.f32.mxu0 %v412
    %492 = vmatmul.mubr.f32.gmra.mxu0 %v278
    %v493 = vpop.f32.mrf.mxu0
    %v494 = vadd.f32 %v393, %v493
    %v495 = vpop.f32.mrf.mxu0
    %v496 = vadd.f32 %v397, %v495
    %497 = vdwg.mxu0
    %498 = vmatprep.subr.mxu0 %v343
    %499 = vmatpush1.msra.mxu0 %v342
    %500 = vmatprep.subr.mxu0 %v339
    %501 = vmatpush1.msra.mxu0 %v338
    %502 = vmatprep.subr.mxu0 %v335
    %503 = vmatpush1.msra.mxu0 %v334
    %504 = vmatprep.subr.mxu0 %v331
    %505 = vmatpush1.msra.mxu0 %v330
    %506 = vmatprep.subr.mxu0 %v327
    %507 = vmatpush1.msra.mxu0 %v326
    %508 = vmatprep.subr.mxu0 %v323
    %509 = vmatpush1.msra.mxu0 %v322
    %510 = vmatprep.subr.mxu0 %v319
    %511 = vmatpush1.msra.mxu0 %v318
    %512 = vmatprep.subr.mxu0 %v315
    %513 = vmatpush1.msra.mxu0 %v314
    %514 = vmatprep.subr.mxu0 %v311
    %515 = vmatpush1.msra.mxu0 %v310
    %516 = vmatprep.subr.mxu0 %v307
    %517 = vmatpush1.msra.mxu0 %v306
    %518 = vmatprep.subr.mxu0 %v303
    %519 = vmatpush1.msra.mxu0 %v302
    %520 = vmatprep.subr.mxu0 %v299
    %521 = vmatpush1.msra.mxu0 %v298
    %522 = vmatprep.subr.mxu0 %v295
    %523 = vmatpush1.msra.mxu0 %v294
    %524 = vmatprep.subr.mxu0 %v291
    %525 = vmatpush1.msra.mxu0 %v290
    %526 = vmatprep.subr.mxu0 %v287
    %527 = vmatpush1.msra.mxu0 %v286
    %528 = vmatprep.subr.mxu0 %v283
    %529 = vmatpush1.msra.mxu0 %v282
    %530 = vmatprep.subr.mxu0 0.0
    %531 = vmatpush2.msra.mxu0 0.0
    %532 = vmatprep.subr.mxu0 0.0
    %533 = vmatpush2.msra.mxu0 0.0
    %534 = vmatprep.subr.mxu0 0.0
    %535 = vmatpush2.msra.mxu0 0.0
    %536 = vmatprep.subr.mxu0 0.0
    %537 = vmatpush2.msra.mxu0 0.0
    %538 = vmatprep.subr.mxu0 0.0
    %539 = vmatpush2.msra.mxu0 0.0
    %540 = vmatprep.subr.mxu0 %v425
    %541 = vmatpush2.msra.mxu0 %v422
    %542 = vmatprep.subr.mxu0 %v383
    %543 = vmatpush2.msra.mxu0 %v382
    %544 = vmatprep.subr.mxu0 %v379
    %545 = vmatpush2.msra.mxu0 %v378
    %546 = vmatprep.subr.mxu0 %v375
    %547 = vmatpush2.msra.mxu0 %v374
    %548 = vmatprep.subr.mxu0 %v371
    %549 = vmatpush2.msra.mxu0 %v370
    %550 = vmatprep.subr.mxu0 %v367
    %551 = vmatpush2.msra.mxu0 %v366
    %552 = vmatprep.subr.mxu0 %v363
    %553 = vmatpush2.msra.mxu0 %v362
    %554 = vmatprep.subr.mxu0 %v359
    %555 = vmatpush2.msra.mxu0 %v358
    %556 = vmatprep.subr.mxu0 %v355
    %557 = vmatpush2.msra.mxu0 %v354
    %558 = vmatprep.subr.mxu0 %v351
    %559 = vmatpush2.msra.mxu0 %v350
    %560 = vmatprep.subr.mxu0 %v347
    %561 = vmatpush2.msra.mxu0 %v346
    %562 = vmatprep.mubr.f32.mxu0 %v412
    %563 = vmatmul.mubr.f32.gmra.mxu0 %v278
    %v564 = vpop.f32.mrf.mxu0
    %v565 = vadd.f32 %v401, %v564
    %v566 = vpop.f32.mrf.mxu0
    %v567 = vadd.f32 %v405, %v566
    %568 = vdwg.mxu0
    %v569 = vmax.f32 %v494, 0.0
    %v570 = vmax.f32 %v496, 0.0
    %v571 = vmax.f32 %v565, 0.0
    %v572 = vmax.f32 %v567, 0.0
    %v573 = vld [vmem:[%s7] sm:$0xff]
    %v574 = vld [vmem:[%s7 + $0x8] sm:$0xff]
    %v575 = vld [vmem:[%s7 + $0x10] sm:$0xff]
    %v576 = vld [vmem:[%s7 + $0x18] sm:$0xff]
    %v577 = vld [vmem:[%s7 + $0x20] sm:$0xff]
    %v578 = vld [vmem:[%s7 + $0x28] sm:$0xff]
    %v579 = vld [vmem:[%s7 + $0x30] sm:$0xff]
    %v580 = vld [vmem:[%s7 + $0x38] sm:$0xff]
    %v581 = vld [vmem:[%s7 + $0x40] sm:$0xff]
    %v582 = vld [vmem:[%s7 + $0x48] sm:$0xff]
    %v583 = vld [vmem:[%s7 + $0x50] sm:$0xff]
    %v584 = vld [vmem:[%s7 + $0x58] sm:$0xff]
    %v585 = vld [vmem:[%s7 + $0x60] sm:$0xff]
    %v586 = vld [vmem:[%s7 + $0x68] sm:$0xff]
    %v587 = vld [vmem:[%s7 + $0x70] sm:$0xff]
    %v588 = vld [vmem:[%s7 + $0x78] sm:$0xff]
    %v589 = vld [vmem:[%s7 + $0x80] sm:$0xff]
    %v590 = vld [vmem:[%s7 + $0x88] sm:$0xff]
    %v591 = vld [vmem:[%s7 + $0x90] sm:$0xff]
    %v592 = vld [vmem:[%s7 + $0x98] sm:$0xff]
    %v593 = vld [vmem:[%s7 + $0xa0] sm:$0xff]
    %v594 = vld [vmem:[%s7 + $0xa8] sm:$0xff]
    %v595 = vld [vmem:[%s7 + $0xb0] sm:$0xff]
    %v596 = vld [vmem:[%s7 + $0xb8] sm:$0xff]
    %v597 = vld [vmem:[%s7 + $0xc0] sm:$0xff]
    %v598 = vld [vmem:[%s7 + $0xc8] sm:$0xff]
    %v599 = vld [vmem:[%s7 + $0xd0] sm:$0xff]
    %v600 = vld [vmem:[%s7 + $0xd8] sm:$0xff]
    %v601 = vld [vmem:[%s7 + $0xe0] sm:$0xff]
    %v602 = vld [vmem:[%s7 + $0xe8] sm:$0xff]
    %v603 = vld [vmem:[%s7 + $0xf0] sm:$0xff]
    %v604 = vld [vmem:[%s7 + $0xf8] sm:$0xff]
    %v605 = vld [vmem:[%s7 + $0x100] sm:$0xff]
    %v606 = vld [vmem:[%s7 + $0x108] sm:$0xff]
    %v607 = vld [vmem:[%s7 + $0x110] sm:$0xff]
    %v608 = vld [vmem:[%s7 + $0x118] sm:$0xff]
    %v609 = vld [vmem:[%s7 + $0x120] sm:$0xff]
    %v610 = vld [vmem:[%s7 + $0x128] sm:$0xff]
    %v611 = vld [vmem:[%s7 + $0x130] sm:$0xff]
    %v612 = vld [vmem:[%s7 + $0x138] sm:$0xff]
    %v613 = vld [vmem:[%s7 + $0x140] sm:$0xff]
    %v614 = vld [vmem:[%s7 + $0x148] sm:$0xff]
    %v615 = vld [vmem:[%s7 + $0x150] sm:$0xff]
    %v616 = vld [vmem:[%s7 + $0x158] sm:$0xff]
    %v617 = vld [vmem:[%s7 + $0x160] sm:$0xff]
    %v618 = vld [vmem:[%s7 + $0x168] sm:$0xff]
    %v619 = vld [vmem:[%s7 + $0x170] sm:$0xff]
    %v620 = vld [vmem:[%s7 + $0x178] sm:$0xff]
    %v621 = vld [vmem:[%s7 + $0x180] sm:$0xff]
    %v622 = vld [vmem:[%s7 + $0x188] sm:$0xff]
    %v623 = vld [vmem:[%s7 + $0x190] sm:$0xff]
    %v624 = vld [vmem:[%s7 + $0x198] sm:$0xff]
    %v625 = vld [vmem:[%s7 + $0x1a0] sm:$0xff]
    %v626 = vld [vmem:[%s7 + $0x1a8] sm:$0xff]
    %v627 = vld [vmem:[%s7 + $0x1b0] sm:$0xff]
    %v628 = vld [vmem:[%s7 + $0x1b8] sm:$0xff]
    %v629 = vld [vmem:[%s7 + $0x1c0] sm:$0xff]
    %v630 = vld [vmem:[%s7 + $0x1c8] sm:$0xff]
    %v631 = vld [vmem:[%s7 + $0x1d0] sm:$0xff]
    %v632 = vld [vmem:[%s7 + $0x1d8] sm:$0xff]
    %v633 = vld [vmem:[%s7 + $0x1e0] sm:$0xff]
    %v634 = vld [vmem:[%s7 + $0x1e8] sm:$0xff]
    %v635 = vld [vmem:[%s7 + $0x1f0] sm:$0xff]
    %v636 = vld [vmem:[%s7 + $0x1f8] sm:$0xff]
    %v637 = vld [vmem:[%s7 + $0x200] sm:$0xff]
    %v638 = vld [vmem:[%s7 + $0x208] sm:$0xff]
    %v639 = vld [vmem:[%s7 + $0x210] sm:$0xff]
    %v640 = vld [vmem:[%s7 + $0x218] sm:$0xff]
    %v641 = vld [vmem:[%s7 + $0x220] sm:$0xff]
    %v642 = vld [vmem:[%s7 + $0x228] sm:$0xff]
    %v643 = vld [vmem:[%s7 + $0x230] sm:$0xff]
    %v644 = vld [vmem:[%s7 + $0x238] sm:$0xff]
    %v645 = vld [vmem:[%s7 + $0x240] sm:$0xff]
    %v646 = vld [vmem:[%s7 + $0x248] sm:$0xff]
    %v647 = vld [vmem:[%s7 + $0x250] sm:$0xff]
    %v648 = vld [vmem:[%s7 + $0x258] sm:$0xff]
    %v649 = vld [vmem:[%s7 + $0x260] sm:$0xff]
    %v650 = vld [vmem:[%s7 + $0x268] sm:$0xff]
    %v651 = vld [vmem:[%s7 + $0x270] sm:$0xff]
    %v652 = vld [vmem:[%s7 + $0x278] sm:$0xff]
    %v653 = vld [vmem:[%s7 + $0x280] sm:$0xff]
    %v654 = vld [vmem:[%s7 + $0x288] sm:$0xff]
    %v655 = vld [vmem:[%s7 + $0x290] sm:$0xff]
    %v656 = vld [vmem:[%s7 + $0x298] sm:$0xff]
    %v657 = vld [vmem:[%s7 + $0x2a0] sm:$0xff]
    %v658 = vld [vmem:[%s7 + $0x2a8] sm:$0xff]
    %v659 = vld [vmem:[%s7 + $0x2b0] sm:$0xff]
    %v660 = vld [vmem:[%s7 + $0x2b8] sm:$0xff]
    %v661 = vld [vmem:[%s7 + $0x2c0] sm:$0xff]
    %v662 = vld [vmem:[%s7 + $0x2c8] sm:$0xff]
    %v663 = vld [vmem:[%s7 + $0x2d0] sm:$0xff]
    %v664 = vld [vmem:[%s7 + $0x2d8] sm:$0xff]
    %v665 = vld [vmem:[%s7 + $0x2e0] sm:$0xff]
    %v666 = vld [vmem:[%s7 + $0x2e8] sm:$0xff]
    %v667 = vld [vmem:[%s7 + $0x2f0] sm:$0xff]
    %v668 = vld [vmem:[%s7 + $0x2f8] sm:$0xff]
    %v669 = vld [vmem:[%s7 + $0x300] sm:$0xff]
    %v670 = vld [vmem:[%s7 + $0x308] sm:$0xff]
    %v671 = vld [vmem:[%s7 + $0x310] sm:$0xff]
    %v672 = vld [vmem:[%s7 + $0x318] sm:$0xff]
    %v673 = vld [vmem:[%s7 + $0x320] sm:$0xff]
    %v674 = vld [vmem:[%s7 + $0x328] sm:$0xff]
    %v675 = vld [vmem:[%s7 + $0x330] sm:$0xff]
    %v676 = vld [vmem:[%s7 + $0x338] sm:$0xff]
    %v677 = vld [vmem:[%s7 + $0x340] sm:$0xff]
    %v678 = vld [vmem:[%s7 + $0x348] sm:$0xff]
    %v679 = vld [vmem:[%s7 + $0x350] sm:$0xff]
    %v680 = vld [vmem:[%s7 + $0x358] sm:$0xff]
    %v681 = vld [vmem:[%s7 + $0x360] sm:$0xff]
    %v682 = vld [vmem:[%s7 + $0x368] sm:$0xff]
    %v683 = vld [vmem:[%s7 + $0x370] sm:$0xff]
    %v684 = vld [vmem:[%s7 + $0x378] sm:$0xff]
    %v685 = vld [vmem:[%s7 + $0x380] sm:$0xff]
    %v686 = vld [vmem:[%s7 + $0x388] sm:$0xff]
    %v687 = vld [vmem:[%s7 + $0x390] sm:$0xff]
    %v688 = vld [vmem:[%s7 + $0x398] sm:$0xff]
    %v689 = vld [vmem:[%s7 + $0x3a0] sm:$0xff]
    %v690 = vld [vmem:[%s7 + $0x3a8] sm:$0xff]
    %v691 = vld [vmem:[%s7 + $0x3b0] sm:$0xff]
    %v692 = vld [vmem:[%s7 + $0x3b8] sm:$0xff]
    %v693 = vld [vmem:[%s7 + $0x3c0] sm:$0xff]
    %v694 = vld [vmem:[%s7 + $0x3c8] sm:$0xff]
    %v695 = vld [vmem:[%s7 + $0x3d0] sm:$0xff]
    %v696 = vld [vmem:[%s7 + $0x3d8] sm:$0xff]
    %v697 = vld [vmem:[%s7 + $0x3e0] sm:$0xff]
    %v698 = vld [vmem:[%s7 + $0x3e8] sm:$0xff]
    %v699 = vld [vmem:[%s7 + $0x3f0] sm:$0xff]
    %v700 = vld [vmem:[%s7 + $0x3f8] sm:$0xff]
    %v701 = vld [vmem:[%s7 + $0x400] sm:$0xff]
    %v702 = vld [vmem:[%s7 + $0x408] sm:$0xff]
    %v703 = vld [vmem:[%s7 + $0x410] sm:$0xff]
    %v704 = vld [vmem:[%s7 + $0x418] sm:$0xff]
    %v705 = vld [vmem:[%s7 + $0x420] sm:$0xff]
    %v706 = vld [vmem:[%s7 + $0x428] sm:$0xff]
    %v707 = vld [vmem:[%s7 + $0x430] sm:$0xff]
    %v708 = vld [vmem:[%s7 + $0x438] sm:$0xff]
    %v709 = vld [vmem:[%s7 + $0x440] sm:$0xff]
    %v710 = vld [vmem:[%s7 + $0x448] sm:$0xff]
    %v711 = vld [vmem:[%s7 + $0x450] sm:$0xff]
    %v712 = vld [vmem:[%s7 + $0x458] sm:$0xff]
    %v713 = vld [vmem:[%s7 + $0x460] sm:$0xff]
    %v714 = vld [vmem:[%s7 + $0x468] sm:$0xff]
    %v715 = vld [vmem:[%s7 + $0x470] sm:$0xff]
    %v716 = vld [vmem:[%s7 + $0x478] sm:$0xff]
    %v717 = vld [vmem:[%s7 + $0x480] sm:$0xff]
    %v718 = vld [vmem:[%s7 + $0x488] sm:$0xff]
    %v719 = vld [vmem:[%s7 + $0x490] sm:$0xff]
    %v720 = vld [vmem:[%s7 + $0x498] sm:$0xff]
    %v721 = vld [vmem:[%s7 + $0x4a0] sm:$0xff]
    %v722 = vld [vmem:[%s7 + $0x4a8] sm:$0xff]
    %v723 = vld [vmem:[%s7 + $0x4b0] sm:$0xff]
    %v724 = vld [vmem:[%s7 + $0x4b8] sm:$0xff]
    %v725 = vld [vmem:[%s7 + $0x4c0] sm:$0xff]
    %v726 = vld [vmem:[%s7 + $0x4c8] sm:$0xff]
    %v727 = vld [vmem:[%s7 + $0x4d0] sm:$0xff]
    %v728 = vld [vmem:[%s7 + $0x4d8] sm:$0xff]
    %v729 = vld [vmem:[%s7 + $0x4e0] sm:$0xff]
    %v730 = vld [vmem:[%s7 + $0x4e8] sm:$0xff]
    %v731 = vld [vmem:[%s7 + $0x4f0] sm:$0xff]
    %v732 = vld [vmem:[%s7 + $0x4f8] sm:$0xff]
    %v733 = vld [vmem:[%s7 + $0x500] sm:$0xff]
    %v734 = vld [vmem:[%s7 + $0x508] sm:$0xff]
    %v735 = vld [vmem:[%s7 + $0x510] sm:$0xff]
    %v736 = vld [vmem:[%s7 + $0x518] sm:$0xff]
    %v737 = vld [vmem:[%s7 + $0x520] sm:$0xff]
    %v738 = vld [vmem:[%s7 + $0x528] sm:$0xff]
    %v739 = vld [vmem:[%s7 + $0x530] sm:$0xff]
    %v740 = vld [vmem:[%s7 + $0x538] sm:$0xff]
    %v741 = vld [vmem:[%s7 + $0x540] sm:$0xff]
    %v742 = vld [vmem:[%s7 + $0x548] sm:$0xff]
    %v743 = vld [vmem:[%s7 + $0x550] sm:$0xff]
    %v744 = vld [vmem:[%s7 + $0x558] sm:$0xff]
    %v745 = vld [vmem:[%s7 + $0x560] sm:$0xff]
    %v746 = vld [vmem:[%s7 + $0x568] sm:$0xff]
    %v747 = vld [vmem:[%s7 + $0x570] sm:$0xff]
    %v748 = vld [vmem:[%s7 + $0x578] sm:$0xff]
    %v749 = vld [vmem:[%s7 + $0x580] sm:$0xff]
    %v750 = vld [vmem:[%s7 + $0x588] sm:$0xff]
    %v751 = vld [vmem:[%s7 + $0x590] sm:$0xff]
    %v752 = vld [vmem:[%s7 + $0x598] sm:$0xff]
    %v753 = vld [vmem:[%s7 + $0x5a0] sm:$0xff]
    %v754 = vld [vmem:[%s7 + $0x5a8] sm:$0xff]
    %v755 = vld [vmem:[%s7 + $0x5b0] sm:$0xff]
    %v756 = vld [vmem:[%s7 + $0x5b8] sm:$0xff]
    %v757 = vld [vmem:[%s7 + $0x5c0] sm:$0xff]
    %v758 = vld [vmem:[%s7 + $0x5c8] sm:$0xff]
    %v759 = vld [vmem:[%s7 + $0x5d0] sm:$0xff]
    %v760 = vld [vmem:[%s7 + $0x5d8] sm:$0xff]
    %v761 = vld [vmem:[%s7 + $0x5e0] sm:$0xff]
    %v762 = vld [vmem:[%s7 + $0x5e8] sm:$0xff]
    %v763 = vld [vmem:[%s7 + $0x5f0] sm:$0xff]
    %v764 = vld [vmem:[%s7 + $0x5f8] sm:$0xff]
    %v765 = vld [vmem:[%s7 + $0x600] sm:$0xff]
    %v766 = vld [vmem:[%s7 + $0x608] sm:$0xff]
    %v767 = vld [vmem:[%s7 + $0x610] sm:$0xff]
    %v768 = vld [vmem:[%s7 + $0x618] sm:$0xff]
    %v769 = vld [vmem:[%s7 + $0x620] sm:$0xff]
    %v770 = vld [vmem:[%s7 + $0x628] sm:$0xff]
    %v771 = vld [vmem:[%s7 + $0x630] sm:$0xff]
    %v772 = vld [vmem:[%s7 + $0x638] sm:$0xff]
    %v773 = vld [vmem:[%s7 + $0x640] sm:$0xff]
    %v774 = vld [vmem:[%s7 + $0x648] sm:$0xff]
    %v775 = vld [vmem:[%s7 + $0x650] sm:$0xff]
    %v776 = vld [vmem:[%s7 + $0x658] sm:$0xff]
    %v777 = vld [vmem:[%s7 + $0x660] sm:$0xff]
    %v778 = vld [vmem:[%s7 + $0x668] sm:$0xff]
    %v779 = vld [vmem:[%s7 + $0x670] sm:$0xff]
    %v780 = vld [vmem:[%s7 + $0x678] sm:$0xff]
    %v781 = vld [vmem:[%s7 + $0x680] sm:$0xff]
    %v782 = vld [vmem:[%s7 + $0x688] sm:$0xff]
    %v783 = vld [vmem:[%s7 + $0x690] sm:$0xff]
    %v784 = vld [vmem:[%s7 + $0x698] sm:$0xff]
    %v785 = vld [vmem:[%s7 + $0x6a0] sm:$0xff]
    %v786 = vld [vmem:[%s7 + $0x6a8] sm:$0xff]
    %v787 = vld [vmem:[%s7 + $0x6b0] sm:$0xff]
    %v788 = vld [vmem:[%s7 + $0x6b8] sm:$0xff]
    %v789 = vld [vmem:[%s7 + $0x6c0] sm:$0xff]
    %v790 = vld [vmem:[%s7 + $0x6c8] sm:$0xff]
    %v791 = vld [vmem:[%s7 + $0x6d0] sm:$0xff]
    %v792 = vld [vmem:[%s7 + $0x6d8] sm:$0xff]
    %v793 = vld [vmem:[%s7 + $0x6e0] sm:$0xff]
    %v794 = vld [vmem:[%s7 + $0x6e8] sm:$0xff]
    %v795 = vld [vmem:[%s7 + $0x6f0] sm:$0xff]
    %v796 = vld [vmem:[%s7 + $0x6f8] sm:$0xff]
    %v797 = vld [vmem:[%s7 + $0x700] sm:$0xff]
    %v798 = vld [vmem:[%s7 + $0x708] sm:$0xff]
    %v799 = vld [vmem:[%s7 + $0x710] sm:$0xff]
    %v800 = vld [vmem:[%s7 + $0x718] sm:$0xff]
    %v801 = vld [vmem:[%s7 + $0x720] sm:$0xff]
    %v802 = vld [vmem:[%s7 + $0x728] sm:$0xff]
    %v803 = vld [vmem:[%s7 + $0x730] sm:$0xff]
    %v804 = vld [vmem:[%s7 + $0x738] sm:$0xff]
    %v805 = vld [vmem:[%s7 + $0x740] sm:$0xff]
    %v806 = vld [vmem:[%s7 + $0x748] sm:$0xff]
    %v807 = vld [vmem:[%s7 + $0x750] sm:$0xff]
    %v808 = vld [vmem:[%s7 + $0x758] sm:$0xff]
    %v809 = vld [vmem:[%s7 + $0x760] sm:$0xff]
    %v810 = vld [vmem:[%s7 + $0x768] sm:$0xff]
    %v811 = vld [vmem:[%s7 + $0x770] sm:$0xff]
    %v812 = vld [vmem:[%s7 + $0x778] sm:$0xff]
    %v813 = vld [vmem:[%s7 + $0x780] sm:$0xff]
    %v814 = vld [vmem:[%s7 + $0x788] sm:$0xff]
    %v815 = vld [vmem:[%s7 + $0x790] sm:$0xff]
    %v816 = vld [vmem:[%s7 + $0x798] sm:$0xff]
    %v817 = vld [vmem:[%s7 + $0x7a0] sm:$0xff]
    %v818 = vld [vmem:[%s7 + $0x7a8] sm:$0xff]
    %v819 = vld [vmem:[%s7 + $0x7b0] sm:$0xff]
    %v820 = vld [vmem:[%s7 + $0x7b8] sm:$0xff]
    %v821 = vld [vmem:[%s7 + $0x7c0] sm:$0xff]
    %v822 = vld [vmem:[%s7 + $0x7c8] sm:$0xff]
    %v823 = vld [vmem:[%s7 + $0x7d0] sm:$0xff]
    %v824 = vld [vmem:[%s7 + $0x7d8] sm:$0xff]
    %v825 = vld [vmem:[%s7 + $0x7e0] sm:$0xff]
    %v826 = vld [vmem:[%s7 + $0x7e8] sm:$0xff]
    %v827 = vld [vmem:[%s7 + $0x7f0] sm:$0xff]
    %v828 = vld [vmem:[%s7 + $0x7f8] sm:$0xff]
    %v829 = vld [vmem:[%s7 + $0x800] sm:$0xff]
    %v830 = vld [vmem:[%s7 + $0x808] sm:$0xff]
    %v831 = vld [vmem:[%s7 + $0x810] sm:$0xff]
    %v832 = vld [vmem:[%s7 + $0x818] sm:$0xff]
    %v833 = vld [vmem:[%s7 + $0x820] sm:$0xf]
    %v834 = vld [vmem:[%s7 + $0x828] sm:$0xf]
    %v835 = vld [vmem:[%s7 + $0x830] sm:$0xf]
    %v836 = vld [vmem:[%s7 + $0x838] sm:$0xf]
    %v837 = vld [vmem:[%s7 + $0x840] sm:$0xf]
    %v838 = vld [vmem:[%s8] sm:$0x1f]
    %v840 = vlaneseq
    %v841 = vshrl.u32 %v840, 7
    %v842 = vsub.s32 0, %v841
    %v843 = vrot.slane %v838, %v842
    %v844 = vlaneseq
    %v845 = vshrl.u32 %v844, 7
    %v846 = vsub.s32 1, %v845
    %v847 = vrot.slane %v838, %v846
    %v848 = vlaneseq
    %v849 = vshrl.u32 %v848, 7
    %v850 = vsub.s32 2, %v849
    %v851 = vrot.slane %v838, %v850
    %v852 = vlaneseq
    %v853 = vshrl.u32 %v852, 7
    %v854 = vsub.s32 3, %v853
    %v855 = vrot.slane %v838, %v854
    %v856 = vlaneseq
    %v857 = vshrl.u32 %v856, 7
    %v858 = vsub.s32 4, %v857
    %v859 = vrot.slane %v838, %v858
    %vm865 = vcmask 293888
    %v867 = vsel %vm865, %v572, 0
    %vm869 = vcmask 1043456
    %v871 = vsel %vm869, %v833, 0
    %v874 = vsel %vm869, %v834, 0
    %v877 = vsel %vm869, %v835, 0
    %v880 = vsel %vm869, %v836, 0
    %v883 = vsel %vm869, %v837, 0
    %885 = vmatprep.subr.mxu0 %v649
    %886 = vmatpush1.msra.mxu0 %v648
    %887 = vmatprep.subr.mxu0 %v644
    %888 = vmatpush1.msra.mxu0 %v643
    %889 = vmatprep.subr.mxu0 %v639
    %890 = vmatpush1.msra.mxu0 %v638
    %891 = vmatprep.subr.mxu0 %v634
    %892 = vmatpush1.msra.mxu0 %v633
    %893 = vmatprep.subr.mxu0 %v629
    %894 = vmatpush1.msra.mxu0 %v628
    %895 = vmatprep.subr.mxu0 %v624
    %896 = vmatpush1.msra.mxu0 %v623
    %897 = vmatprep.subr.mxu0 %v619
    %898 = vmatpush1.msra.mxu0 %v618
    %899 = vmatprep.subr.mxu0 %v614
    %900 = vmatpush1.msra.mxu0 %v613
    %901 = vmatprep.subr.mxu0 %v609
    %902 = vmatpush1.msra.mxu0 %v608
    %903 = vmatprep.subr.mxu0 %v604
    %904 = vmatpush1.msra.mxu0 %v603
    %905 = vmatprep.subr.mxu0 %v599
    %906 = vmatpush1.msra.mxu0 %v598
    %907 = vmatprep.subr.mxu0 %v594
    %908 = vmatpush1.msra.mxu0 %v593
    %909 = vmatprep.subr.mxu0 %v589
    %910 = vmatpush1.msra.mxu0 %v588
    %911 = vmatprep.subr.mxu0 %v584
    %912 = vmatpush1.msra.mxu0 %v583
    %913 = vmatprep.subr.mxu0 %v579
    %914 = vmatpush1.msra.mxu0 %v578
    %915 = vmatprep.subr.mxu0 %v574
    %916 = vmatpush1.msra.mxu0 %v573
    %917 = vmatprep.subr.mxu0 %v729
    %918 = vmatpush2.msra.mxu0 %v728
    %919 = vmatprep.subr.mxu0 %v724
    %920 = vmatpush2.msra.mxu0 %v723
    %921 = vmatprep.subr.mxu0 %v719
    %922 = vmatpush2.msra.mxu0 %v718
    %923 = vmatprep.subr.mxu0 %v714
    %924 = vmatpush2.msra.mxu0 %v713
    %925 = vmatprep.subr.mxu0 %v709
    %926 = vmatpush2.msra.mxu0 %v708
    %927 = vmatprep.subr.mxu0 %v704
    %928 = vmatpush2.msra.mxu0 %v703
    %929 = vmatprep.subr.mxu0 %v699
    %930 = vmatpush2.msra.mxu0 %v698
    %931 = vmatprep.subr.mxu0 %v694
    %932 = vmatpush2.msra.mxu0 %v693
    %933 = vmatprep.subr.mxu0 %v689
    %934 = vmatpush2.msra.mxu0 %v688
    %935 = vmatprep.subr.mxu0 %v684
    %936 = vmatpush2.msra.mxu0 %v683
    %937 = vmatprep.subr.mxu0 %v679
    %938 = vmatpush2.msra.mxu0 %v678
    %939 = vmatprep.subr.mxu0 %v674
    %940 = vmatpush2.msra.mxu0 %v673
    %941 = vmatprep.subr.mxu0 %v669
    %942 = vmatpush2.msra.mxu0 %v668
    %943 = vmatprep.subr.mxu0 %v664
    %944 = vmatpush2.msra.mxu0 %v663
    %945 = vmatprep.subr.mxu0 %v659
    %946 = vmatpush2.msra.mxu0 %v658
    %947 = vmatprep.subr.mxu0 %v654
    %948 = vmatpush2.msra.mxu0 %v653
    %949 = vmatprep.mubr.f32.mxu0 %v570
    %950 = vmatmul.mubr.f32.gmra.mxu0 %v569
    %v951 = vpop.f32.mrf.mxu0
    %v952 = vadd.f32 %v843, %v951
    %v953 = vpop.f32.mrf.mxu0
    %v954 = vadd.f32 %v847, %v953
    %955 = vdwg.mxu0
    %956 = vmatprep.subr.mxu0 %v809
    %957 = vmatpush1.msra.mxu0 %v808
    %958 = vmatprep.subr.mxu0 %v804
    %959 = vmatpush1.msra.mxu0 %v803
    %960 = vmatprep.subr.mxu0 %v799
    %961 = vmatpush1.msra.mxu0 %v798
    %962 = vmatprep.subr.mxu0 %v794
    %963 = vmatpush1.msra.mxu0 %v793
    %964 = vmatprep.subr.mxu0 %v789
    %965 = vmatpush1.msra.mxu0 %v788
    %966 = vmatprep.subr.mxu0 %v784
    %967 = vmatpush1.msra.mxu0 %v783
    %968 = vmatprep.subr.mxu0 %v779
    %969 = vmatpush1.msra.mxu0 %v778
    %970 = vmatprep.subr.mxu0 %v774
    %971 = vmatpush1.msra.mxu0 %v773
    %972 = vmatprep.subr.mxu0 %v769
    %973 = vmatpush1.msra.mxu0 %v768
    %974 = vmatprep.subr.mxu0 %v764
    %975 = vmatpush1.msra.mxu0 %v763
    %976 = vmatprep.subr.mxu0 %v759
    %977 = vmatpush1.msra.mxu0 %v758
    %978 = vmatprep.subr.mxu0 %v754
    %979 = vmatpush1.msra.mxu0 %v753
    %980 = vmatprep.subr.mxu0 %v749
    %981 = vmatpush1.msra.mxu0 %v748
    %982 = vmatprep.subr.mxu0 %v744
    %983 = vmatpush1.msra.mxu0 %v743
    %984 = vmatprep.subr.mxu0 %v739
    %985 = vmatpush1.msra.mxu0 %v738
    %986 = vmatprep.subr.mxu0 %v734
    %987 = vmatpush1.msra.mxu0 %v733
    %988 = vmatprep.subr.mxu0 0.0
    %989 = vmatpush2.msra.mxu0 0.0
    %990 = vmatprep.subr.mxu0 0.0
    %991 = vmatpush2.msra.mxu0 0.0
    %992 = vmatprep.subr.mxu0 0.0
    %993 = vmatpush2.msra.mxu0 0.0
    %994 = vmatprep.subr.mxu0 0.0
    %995 = vmatpush2.msra.mxu0 0.0
    %996 = vmatprep.subr.mxu0 0.0
    %997 = vmatpush2.msra.mxu0 0.0
    %998 = vmatprep.subr.mxu0 0.0
    %999 = vmatpush2.msra.mxu0 0.0
    %1000 = vmatprep.subr.mxu0 0.0
    %1001 = vmatpush2.msra.mxu0 0.0
    %1002 = vmatprep.subr.mxu0 0.0
    %1003 = vmatpush2.msra.mxu0 0.0
    %1004 = vmatprep.subr.mxu0 0.0
    %1005 = vmatpush2.msra.mxu0 0.0
    %1006 = vmatprep.subr.mxu0 0.0
    %1007 = vmatpush2.msra.mxu0 0.0
    %1008 = vmatprep.subr.mxu0 0.0
    %1009 = vmatpush2.msra.mxu0 0.0
    %1010 = vmatprep.subr.mxu0 %v874
    %1011 = vmatpush2.msra.mxu0 %v871
    %1012 = vmatprep.subr.mxu0 %v829
    %1013 = vmatpush2.msra.mxu0 %v828
    %1014 = vmatprep.subr.mxu0 %v824
    %1015 = vmatpush2.msra.mxu0 %v823
    %1016 = vmatprep.subr.mxu0 %v819
    %1017 = vmatpush2.msra.mxu0 %v818
    %1018 = vmatprep.subr.mxu0 %v814
    %1019 = vmatpush2.msra.mxu0 %v813
    %1020 = vmatprep.mubr.f32.mxu0 %v867
    %1021 = vmatmul.mubr.f32.gmra.mxu0 %v571
    %v1022 = vpop.f32.mrf.mxu0
    %v1023 = vadd.f32 %v952, %v1022
    %v1024 = vpop.f32.mrf.mxu0
    %v1025 = vadd.f32 %v954, %v1024
    %1026 = vdwg.mxu0
    %1027 = vmatprep.subr.mxu0 %v651
    %1028 = vmatpush1.msra.mxu0 %v650
    %1029 = vmatprep.subr.mxu0 %v646
    %1030 = vmatpush1.msra.mxu0 %v645
    %1031 = vmatprep.subr.mxu0 %v641
    %1032 = vmatpush1.msra.mxu0 %v640
    %1033 = vmatprep.subr.mxu0 %v636
    %1034 = vmatpush1.msra.mxu0 %v635
    %1035 = vmatprep.subr.mxu0 %v631
    %1036 = vmatpush1.msra.mxu0 %v630
    %1037 = vmatprep.subr.mxu0 %v626
    %1038 = vmatpush1.msra.mxu0 %v625
    %1039 = vmatprep.subr.mxu0 %v621
    %1040 = vmatpush1.msra.mxu0 %v620
    %1041 = vmatprep.subr.mxu0 %v616
    %1042 = vmatpush1.msra.mxu0 %v615
    %1043 = vmatprep.subr.mxu0 %v611
    %1044 = vmatpush1.msra.mxu0 %v610
    %1045 = vmatprep.subr.mxu0 %v606
    %1046 = vmatpush1.msra.mxu0 %v605
    %1047 = vmatprep.subr.mxu0 %v601
    %1048 = vmatpush1.msra.mxu0 %v600
    %1049 = vmatprep.subr.mxu0 %v596
    %1050 = vmatpush1.msra.mxu0 %v595
    %1051 = vmatprep.subr.mxu0 %v591
    %1052 = vmatpush1.msra.mxu0 %v590
    %1053 = vmatprep.subr.mxu0 %v586
    %1054 = vmatpush1.msra.mxu0 %v585
    %1055 = vmatprep.subr.mxu0 %v581
    %1056 = vmatpush1.msra.mxu0 %v580
    %1057 = vmatprep.subr.mxu0 %v576
    %1058 = vmatpush1.msra.mxu0 %v575
    %1059 = vmatprep.subr.mxu0 %v731
    %1060 = vmatpush2.msra.mxu0 %v730
    %1061 = vmatprep.subr.mxu0 %v726
    %1062 = vmatpush2.msra.mxu0 %v725
    %1063 = vmatprep.subr.mxu0 %v721
    %1064 = vmatpush2.msra.mxu0 %v720
    %1065 = vmatprep.subr.mxu0 %v716
    %1066 = vmatpush2.msra.mxu0 %v715
    %1067 = vmatprep.subr.mxu0 %v711
    %1068 = vmatpush2.msra.mxu0 %v710
    %1069 = vmatprep.subr.mxu0 %v706
    %1070 = vmatpush2.msra.mxu0 %v705
    %1071 = vmatprep.subr.mxu0 %v701
    %1072 = vmatpush2.msra.mxu0 %v700
    %1073 = vmatprep.subr.mxu0 %v696
    %1074 = vmatpush2.msra.mxu0 %v695
    %1075 = vmatprep.subr.mxu0 %v691
    %1076 = vmatpush2.msra.mxu0 %v690
    %1077 = vmatprep.subr.mxu0 %v686
    %1078 = vmatpush2.msra.mxu0 %v685
    %1079 = vmatprep.subr.mxu0 %v681
    %1080 = vmatpush2.msra.mxu0 %v680
    %1081 = vmatprep.subr.mxu0 %v676
    %1082 = vmatpush2.msra.mxu0 %v675
    %1083 = vmatprep.subr.mxu0 %v671
    %1084 = vmatpush2.msra.mxu0 %v670
    %1085 = vmatprep.subr.mxu0 %v666
    %1086 = vmatpush2.msra.mxu0 %v665
    %1087 = vmatprep.subr.mxu0 %v661
    %1088 = vmatpush2.msra.mxu0 %v660
    %1089 = vmatprep.subr.mxu0 %v656
    %1090 = vmatpush2.msra.mxu0 %v655
    %1091 = vmatprep.mubr.f32.mxu0 %v570
    %1092 = vmatmul.mubr.f32.gmra.mxu0 %v569
    %v1093 = vpop.f32.mrf.mxu0
    %v1094 = vadd.f32 %v851, %v1093
    %v1095 = vpop.f32.mrf.mxu0
    %v1096 = vadd.f32 %v855, %v1095
    %1097 = vdwg.mxu0
    %1098 = vmatprep.subr.mxu0 %v811
    %1099 = vmatpush1.msra.mxu0 %v810
    %1100 = vmatprep.subr.mxu0 %v806
    %1101 = vmatpush1.msra.mxu0 %v805
    %1102 = vmatprep.subr.mxu0 %v801
    %1103 = vmatpush1.msra.mxu0 %v800
    %1104 = vmatprep.subr.mxu0 %v796
    %1105 = vmatpush1.msra.mxu0 %v795
    %1106 = vmatprep.subr.mxu0 %v791
    %1107 = vmatpush1.msra.mxu0 %v790
    %1108 = vmatprep.subr.mxu0 %v786
    %1109 = vmatpush1.msra.mxu0 %v785
    %1110 = vmatprep.subr.mxu0 %v781
    %1111 = vmatpush1.msra.mxu0 %v780
    %1112 = vmatprep.subr.mxu0 %v776
    %1113 = vmatpush1.msra.mxu0 %v775
    %1114 = vmatprep.subr.mxu0 %v771
    %1115 = vmatpush1.msra.mxu0 %v770
    %1116 = vmatprep.subr.mxu0 %v766
    %1117 = vmatpush1.msra.mxu0 %v765
    %1118 = vmatprep.subr.mxu0 %v761
    %1119 = vmatpush1.msra.mxu0 %v760
    %1120 = vmatprep.subr.mxu0 %v756
    %1121 = vmatpush1.msra.mxu0 %v755
    %1122 = vmatprep.subr.mxu0 %v751
    %1123 = vmatpush1.msra.mxu0 %v750
    %1124 = vmatprep.subr.mxu0 %v746
    %1125 = vmatpush1.msra.mxu0 %v745
    %1126 = vmatprep.subr.mxu0 %v741
    %1127 = vmatpush1.msra.mxu0 %v740
    %1128 = vmatprep.subr.mxu0 %v736
    %1129 = vmatpush1.msra.mxu0 %v735
    %1130 = vmatprep.subr.mxu0 0.0
    %1131 = vmatpush2.msra.mxu0 0.0
    %1132 = vmatprep.subr.mxu0 0.0
    %1133 = vmatpush2.msra.mxu0 0.0
    %1134 = vmatprep.subr.mxu0 0.0
    %1135 = vmatpush2.msra.mxu0 0.0
    %1136 = vmatprep.subr.mxu0 0.0
    %1137 = vmatpush2.msra.mxu0 0.0
    %1138 = vmatprep.subr.mxu0 0.0
    %1139 = vmatpush2.msra.mxu0 0.0
    %1140 = vmatprep.subr.mxu0 0.0
    %1141 = vmatpush2.msra.mxu0 0.0
    %1142 = vmatprep.subr.mxu0 0.0
    %1143 = vmatpush2.msra.mxu0 0.0
    %1144 = vmatprep.subr.mxu0 0.0
    %1145 = vmatpush2.msra.mxu0 0.0
    %1146 = vmatprep.subr.mxu0 0.0
    %1147 = vmatpush2.msra.mxu0 0.0
    %1148 = vmatprep.subr.mxu0 0.0
    %1149 = vmatpush2.msra.mxu0 0.0
    %1150 = vmatprep.subr.mxu0 0.0
    %1151 = vmatpush2.msra.mxu0 0.0
    %1152 = vmatprep.subr.mxu0 %v880
    %1153 = vmatpush2.msra.mxu0 %v877
    %1154 = vmatprep.subr.mxu0 %v831
    %1155 = vmatpush2.msra.mxu0 %v830
    %1156 = vmatprep.subr.mxu0 %v826
    %1157 = vmatpush2.msra.mxu0 %v825
    %1158 = vmatprep.subr.mxu0 %v821
    %1159 = vmatpush2.msra.mxu0 %v820
    %1160 = vmatprep.subr.mxu0 %v816
    %1161 = vmatpush2.msra.mxu0 %v815
    %1162 = vmatprep.mubr.f32.mxu0 %v867
    %1163 = vmatmul.mubr.f32.gmra.mxu0 %v571
    %v1164 = vpop.f32.mrf.mxu0
    %v1165 = vadd.f32 %v1094, %v1164
    %v1166 = vpop.f32.mrf.mxu0
    %v1167 = vadd.f32 %v1096, %v1166
    %1168 = vdwg.mxu0
    %1169 = vmatprep.subr.mxu0 0.0
    %1170 = vmatpush1.msra.mxu0 %v652
    %1171 = vmatprep.subr.mxu0 0.0
    %1172 = vmatpush1.msra.mxu0 %v647
    %1173 = vmatprep.subr.mxu0 0.0
    %1174 = vmatpush1.msra.mxu0 %v642
    %1175 = vmatprep.subr.mxu0 0.0
    %1176 = vmatpush1.msra.mxu0 %v637
    %1177 = vmatprep.subr.mxu0 0.0
    %1178 = vmatpush1.msra.mxu0 %v632
    %1179 = vmatprep.subr.mxu0 0.0
    %1180 = vmatpush1.msra.mxu0 %v627
    %1181 = vmatprep.subr.mxu0 0.0
    %1182 = vmatpush1.msra.mxu0 %v622
    %1183 = vmatprep.subr.mxu0 0.0
    %1184 = vmatpush1.msra.mxu0 %v617
    %1185 = vmatprep.subr.mxu0 0.0
    %1186 = vmatpush1.msra.mxu0 %v612
    %1187 = vmatprep.subr.mxu0 0.0
    %1188 = vmatpush1.msra.mxu0 %v607
    %1189 = vmatprep.subr.mxu0 0.0
    %1190 = vmatpush1.msra.mxu0 %v602
    %1191 = vmatprep.subr.mxu0 0.0
    %1192 = vmatpush1.msra.mxu0 %v597
    %1193 = vmatprep.subr.mxu0 0.0
    %1194 = vmatpush1.msra.mxu0 %v592
    %1195 = vmatprep.subr.mxu0 0.0
    %1196 = vmatpush1.msra.mxu0 %v587
    %1197 = vmatprep.subr.mxu0 0.0
    %1198 = vmatpush1.msra.mxu0 %v582
    %1199 = vmatprep.subr.mxu0 0.0
    %1200 = vmatpush1.msra.mxu0 %v577
    %1201 = vmatprep.subr.mxu0 0.0
    %1202 = vmatpush2.msra.mxu0 %v732
    %1203 = vmatprep.subr.mxu0 0.0
    %1204 = vmatpush2.msra.mxu0 %v727
    %1205 = vmatprep.subr.mxu0 0.0
    %1206 = vmatpush2.msra.mxu0 %v722
    %1207 = vmatprep.subr.mxu0 0.0
    %1208 = vmatpush2.msra.mxu0 %v717
    %1209 = vmatprep.subr.mxu0 0.0
    %1210 = vmatpush2.msra.mxu0 %v712
    %1211 = vmatprep.subr.mxu0 0.0
    %1212 = vmatpush2.msra.mxu0 %v707
    %1213 = vmatprep.subr.mxu0 0.0
    %1214 = vmatpush2.msra.mxu0 %v702
    %1215 = vmatprep.subr.mxu0 0.0
    %1216 = vmatpush2.msra.mxu0 %v697
    %1217 = vmatprep.subr.mxu0 0.0
    %1218 = vmatpush2.msra.mxu0 %v692
    %1219 = vmatprep.subr.mxu0 0.0
    %1220 = vmatpush2.msra.mxu0 %v687
    %1221 = vmatprep.subr.mxu0 0.0
    %1222 = vmatpush2.msra.mxu0 %v682
    %1223 = vmatprep.subr.mxu0 0.0
    %1224 = vmatpush2.msra.mxu0 %v677
    %1225 = vmatprep.subr.mxu0 0.0
    %1226 = vmatpush2.msra.mxu0 %v672
    %1227 = vmatprep.subr.mxu0 0.0
    %1228 = vmatpush2.msra.mxu0 %v667
    %1229 = vmatprep.subr.mxu0 0.0
    %1230 = vmatpush2.msra.mxu0 %v662
    %1231 = vmatprep.subr.mxu0 0.0
    %1232 = vmatpush2.msra.mxu0 %v657
    %1233 = vmatprep.mubr.f32.mxu0 %v570
    %1234 = vmatmul.mubr.f32.gmra.mxu0 %v569
    %v1235 = vpop.f32.mrf.mxu0
    %v1236 = vadd.f32 %v859, %v1235
    %v1237 = vpop.f32.mrf.mxu0
    %1238 = vdwg.mxu0
    %1239 = vmatprep.subr.mxu0 0.0
    %1240 = vmatpush1.msra.mxu0 %v812
    %1241 = vmatprep.subr.mxu0 0.0
    %1242 = vmatpush1.msra.mxu0 %v807
    %1243 = vmatprep.subr.mxu0 0.0
    %1244 = vmatpush1.msra.mxu0 %v802
    %1245 = vmatprep.subr.mxu0 0.0
    %1246 = vmatpush1.msra.mxu0 %v797
    %1247 = vmatprep.subr.mxu0 0.0
    %1248 = vmatpush1.msra.mxu0 %v792
    %1249 = vmatprep.subr.mxu0 0.0
    %1250 = vmatpush1.msra.mxu0 %v787
    %1251 = vmatprep.subr.mxu0 0.0
    %1252 = vmatpush1.msra.mxu0 %v782
    %1253 = vmatprep.subr.mxu0 0.0
    %1254 = vmatpush1.msra.mxu0 %v777
    %1255 = vmatprep.subr.mxu0 0.0
    %1256 = vmatpush1.msra.mxu0 %v772
    %1257 = vmatprep.subr.mxu0 0.0
    %1258 = vmatpush1.msra.mxu0 %v767
    %1259 = vmatprep.subr.mxu0 0.0
    %1260 = vmatpush1.msra.mxu0 %v762
    %1261 = vmatprep.subr.mxu0 0.0
    %1262 = vmatpush1.msra.mxu0 %v757
    %1263 = vmatprep.subr.mxu0 0.0
    %1264 = vmatpush1.msra.mxu0 %v752
    %1265 = vmatprep.subr.mxu0 0.0
    %1266 = vmatpush1.msra.mxu0 %v747
    %1267 = vmatprep.subr.mxu0 0.0
    %1268 = vmatpush1.msra.mxu0 %v742
    %1269 = vmatprep.subr.mxu0 0.0
    %1270 = vmatpush1.msra.mxu0 %v737
    %1271 = vmatprep.subr.mxu0 0.0
    %1272 = vmatpush2.msra.mxu0 0.0
    %1273 = vmatprep.subr.mxu0 0.0
    %1274 = vmatpush2.msra.mxu0 0.0
    %1275 = vmatprep.subr.mxu0 0.0
    %1276 = vmatpush2.msra.mxu0 0.0
    %1277 = vmatprep.subr.mxu0 0.0
    %1278 = vmatpush2.msra.mxu0 0.0
    %1279 = vmatprep.subr.mxu0 0.0
    %1280 = vmatpush2.msra.mxu0 0.0
    %1281 = vmatprep.subr.mxu0 0.0
    %1282 = vmatpush2.msra.mxu0 0.0
    %1283 = vmatprep.subr.mxu0 0.0
    %1284 = vmatpush2.msra.mxu0 0.0
    %1285 = vmatprep.subr.mxu0 0.0
    %1286 = vmatpush2.msra.mxu0 0.0
    %1287 = vmatprep.subr.mxu0 0.0
    %1288 = vmatpush2.msra.mxu0 0.0
    %1289 = vmatprep.subr.mxu0 0.0
    %1290 = vmatpush2.msra.mxu0 0.0
    %1291 = vmatprep.subr.mxu0 0.0
    %1292 = vmatpush2.msra.mxu0 0.0
    %1293 = vmatprep.subr.mxu0 0.0
    %1294 = vmatpush2.msra.mxu0 %v883
    %1295 = vmatprep.subr.mxu0 0.0
    %1296 = vmatpush2.msra.mxu0 %v832
    %1297 = vmatprep.subr.mxu0 0.0
    %1298 = vmatpush2.msra.mxu0 %v827
    %1299 = vmatprep.subr.mxu0 0.0
    %1300 = vmatpush2.msra.mxu0 %v822
    %1301 = vmatprep.subr.mxu0 0.0
    %1302 = vmatpush2.msra.mxu0 %v817
    %1303 = vmatprep.mubr.f32.mxu0 %v867
    %1304 = vmatmul.mubr.f32.gmra.mxu0 %v571
    %v1305 = vpop.f32.mrf.mxu0
    %v1306 = vadd.f32 %v1236, %v1305
    %v1307 = vpop.f32.mrf.mxu0
    %1308 = vdwg.mxu0
    %v1309 = vmax.f32 %v1023, 0.0
    %v1310 = vmax.f32 %v1025, 0.0
    %v1311 = vmax.f32 %v1165, 0.0
    %v1312 = vmax.f32 %v1167, 0.0
    %v1313 = vmax.f32 %v1306, 0.0
    %v1314 = vld [vmem:[#allocation2] sm:$0xff]
    %v1315 = vld [vmem:[#allocation2 + $0x8] sm:$0xff]
    %v1316 = vld [vmem:[#allocation2 + $0x10] sm:$0xff]
    %v1317 = vld [vmem:[#allocation2 + $0x18] sm:$0xff]
    %v1318 = vld [vmem:[#allocation2 + $0x20] sm:$0xff]
    %v1319 = vld [vmem:[#allocation2 + $0x28] sm:$0xff]
    %v1320 = vld [vmem:[#allocation2 + $0x30] sm:$0xff]
    %v1321 = vld [vmem:[#allocation2 + $0x38] sm:$0xff]
    %v1322 = vld [vmem:[#allocation2 + $0x40] sm:$0xff]
    %v1323 = vld [vmem:[#allocation2 + $0x48] sm:$0xff]
    %v1324 = vld [vmem:[#allocation2 + $0x50] sm:$0xff]
    %v1325 = vld [vmem:[#allocation2 + $0x58] sm:$0xff]
    %v1326 = vld [vmem:[#allocation2 + $0x60] sm:$0xff]
    %v1327 = vld [vmem:[#allocation2 + $0x68] sm:$0xff]
    %v1328 = vld [vmem:[#allocation2 + $0x70] sm:$0xff]
    %v1329 = vld [vmem:[#allocation2 + $0x78] sm:$0xff]
    %v1330 = vld [vmem:[#allocation2 + $0x80] sm:$0xff]
    %v1331 = vld [vmem:[#allocation2 + $0x88] sm:$0xff]
    %v1332 = vld [vmem:[#allocation2 + $0x90] sm:$0xff]
    %v1333 = vld [vmem:[#allocation2 + $0x98] sm:$0xff]
    %v1334 = vld [vmem:[#allocation2 + $0xa0] sm:$0xff]
    %v1335 = vld [vmem:[#allocation2 + $0xa8] sm:$0xff]
    %v1336 = vld [vmem:[#allocation2 + $0xb0] sm:$0xff]
    %v1337 = vld [vmem:[#allocation2 + $0xb8] sm:$0xff]
    %v1338 = vld [vmem:[#allocation2 + $0xc0] sm:$0xff]
    %v1339 = vld [vmem:[#allocation2 + $0xc8] sm:$0xff]
    %v1340 = vld [vmem:[#allocation2 + $0xd0] sm:$0xff]
    %v1341 = vld [vmem:[#allocation2 + $0xd8] sm:$0xff]
    %v1342 = vld [vmem:[#allocation2 + $0xe0] sm:$0xff]
    %v1343 = vld [vmem:[#allocation2 + $0xe8] sm:$0xff]
    %v1344 = vld [vmem:[#allocation2 + $0xf0] sm:$0xff]
    %v1345 = vld [vmem:[#allocation2 + $0xf8] sm:$0xff]
    %v1346 = vld [vmem:[#allocation2 + $0x100] sm:$0xff]
    %v1347 = vld [vmem:[#allocation2 + $0x108] sm:$0xff]
    %v1348 = vld [vmem:[#allocation2 + $0x110] sm:$0xff]
    %v1349 = vld [vmem:[#allocation2 + $0x118] sm:$0xff]
    %v1350 = vld [vmem:[#allocation2 + $0x120] sm:$0xff]
    %v1351 = vld [vmem:[#allocation2 + $0x128] sm:$0xff]
    %v1352 = vld [vmem:[#allocation2 + $0x130] sm:$0xff]
    %v1353 = vld [vmem:[#allocation2 + $0x138] sm:$0xff]
    %v1354 = vld [vmem:[#allocation2 + $0x140] sm:$0xff]
    %v1355 = vld [vmem:[#allocation2 + $0x148] sm:$0xff]
    %v1356 = vld [vmem:[#allocation2 + $0x150] sm:$0xff]
    %v1357 = vld [vmem:[#allocation2 + $0x158] sm:$0xff]
    %v1358 = vld [vmem:[#allocation2 + $0x160] sm:$0xff]
    %v1359 = vld [vmem:[#allocation2 + $0x168] sm:$0xff]
    %v1360 = vld [vmem:[#allocation2 + $0x170] sm:$0xff]
    %v1361 = vld [vmem:[#allocation2 + $0x178] sm:$0xff]
    %v1362 = vld [vmem:[#allocation2 + $0x180] sm:$0xff]
    %v1363 = vld [vmem:[#allocation2 + $0x188] sm:$0xff]
    %v1364 = vld [vmem:[#allocation2 + $0x190] sm:$0xff]
    %v1365 = vld [vmem:[#allocation2 + $0x198] sm:$0xff]
    %v1366 = vld [vmem:[#allocation2 + $0x1a0] sm:$0xff]
    %v1367 = vld [vmem:[#allocation2 + $0x1a8] sm:$0xff]
    %v1368 = vld [vmem:[#allocation2 + $0x1b0] sm:$0xff]
    %v1369 = vld [vmem:[#allocation2 + $0x1b8] sm:$0xff]
    %v1370 = vld [vmem:[#allocation2 + $0x1c0] sm:$0xff]
    %v1371 = vld [vmem:[#allocation2 + $0x1c8] sm:$0xff]
    %v1372 = vld [vmem:[#allocation2 + $0x1d0] sm:$0xff]
    %v1373 = vld [vmem:[#allocation2 + $0x1d8] sm:$0xff]
    %v1374 = vld [vmem:[#allocation2 + $0x1e0] sm:$0xff]
    %v1375 = vld [vmem:[#allocation2 + $0x1e8] sm:$0xff]
    %v1376 = vld [vmem:[#allocation2 + $0x1f0] sm:$0xff]
    %v1377 = vld [vmem:[#allocation2 + $0x1f8] sm:$0xff]
    %v1378 = vld [vmem:[#allocation2 + $0x200] sm:$0xff]
    %v1379 = vld [vmem:[#allocation2 + $0x208] sm:$0xff]
    %v1380 = vld [vmem:[#allocation2 + $0x210] sm:$0xff]
    %v1381 = vld [vmem:[#allocation2 + $0x218] sm:$0xff]
    %v1382 = vld [vmem:[#allocation2 + $0x220] sm:$0xff]
    %v1383 = vld [vmem:[#allocation2 + $0x228] sm:$0xff]
    %v1384 = vld [vmem:[#allocation2 + $0x230] sm:$0xff]
    %v1385 = vld [vmem:[#allocation2 + $0x238] sm:$0xff]
    %v1386 = vld [vmem:[#allocation2 + $0x240] sm:$0xff]
    %v1387 = vld [vmem:[#allocation2 + $0x248] sm:$0xff]
    %v1388 = vld [vmem:[#allocation2 + $0x250] sm:$0xff]
    %v1389 = vld [vmem:[#allocation2 + $0x258] sm:$0xff]
    %v1390 = vld [vmem:[#allocation2 + $0x260] sm:$0xff]
    %v1391 = vld [vmem:[#allocation2 + $0x268] sm:$0xff]
    %v1392 = vld [vmem:[#allocation2 + $0x270] sm:$0x3f]
    %v1393 = vld [vmem:[%s10] sm:$0x1]
    %v1395 = vlaneseq
    %v1396 = vshrl.u32 %v1395, 7
    %v1397 = vsub.s32 0, %v1396
    %v1398 = vrot.slane %v1393, %v1397
    %vm1400 = vcmask 965632
    %v1402 = vsel %vm1400, %v1313, 0
    %v1405 = vsel %vm81, %v1392, 0
    %1407 = vmatprep.subr.mxu0 0.0
    %1408 = vmatpush1.msra.mxu0 %v1329
    %1409 = vmatprep.subr.mxu0 0.0
    %1410 = vmatpush1.msra.mxu0 %v1328
    %1411 = vmatprep.subr.mxu0 0.0
    %1412 = vmatpush1.msra.mxu0 %v1327
    %1413 = vmatprep.subr.mxu0 0.0
    %1414 = vmatpush1.msra.mxu0 %v1326
    %1415 = vmatprep.subr.mxu0 0.0
    %1416 = vmatpush1.msra.mxu0 %v1325
    %1417 = vmatprep.subr.mxu0 0.0
    %1418 = vmatpush1.msra.mxu0 %v1324
    %1419 = vmatprep.subr.mxu0 0.0
    %1420 = vmatpush1.msra.mxu0 %v1323
    %1421 = vmatprep.subr.mxu0 0.0
    %1422 = vmatpush1.msra.mxu0 %v1322
    %1423 = vmatprep.subr.mxu0 0.0
    %1424 = vmatpush1.msra.mxu0 %v1321
    %1425 = vmatprep.subr.mxu0 0.0
    %1426 = vmatpush1.msra.mxu0 %v1320
    %1427 = vmatprep.subr.mxu0 0.0
    %1428 = vmatpush1.msra.mxu0 %v1319
    %1429 = vmatprep.subr.mxu0 0.0
    %1430 = vmatpush1.msra.mxu0 %v1318
    %1431 = vmatprep.subr.mxu0 0.0
    %1432 = vmatpush1.msra.mxu0 %v1317
    %1433 = vmatprep.subr.mxu0 0.0
    %1434 = vmatpush1.msra.mxu0 %v1316
    %1435 = vmatprep.subr.mxu0 0.0
    %1436 = vmatpush1.msra.mxu0 %v1315
    %1437 = vmatprep.subr.mxu0 0.0
    %1438 = vmatpush1.msra.mxu0 %v1314
    %1439 = vmatprep.subr.mxu0 0.0
    %1440 = vmatpush2.msra.mxu0 %v1345
    %1441 = vmatprep.subr.mxu0 0.0
    %1442 = vmatpush2.msra.mxu0 %v1344
    %1443 = vmatprep.subr.mxu0 0.0
    %1444 = vmatpush2.msra.mxu0 %v1343
    %1445 = vmatprep.subr.mxu0 0.0
    %1446 = vmatpush2.msra.mxu0 %v1342
    %1447 = vmatprep.subr.mxu0 0.0
    %1448 = vmatpush2.msra.mxu0 %v1341
    %1449 = vmatprep.subr.mxu0 0.0
    %1450 = vmatpush2.msra.mxu0 %v1340
    %1451 = vmatprep.subr.mxu0 0.0
    %1452 = vmatpush2.msra.mxu0 %v1339
    %1453 = vmatprep.subr.mxu0 0.0
    %1454 = vmatpush2.msra.mxu0 %v1338
    %1455 = vmatprep.subr.mxu0 0.0
    %1456 = vmatpush2.msra.mxu0 %v1337
    %1457 = vmatprep.subr.mxu0 0.0
    %1458 = vmatpush2.msra.mxu0 %v1336
    %1459 = vmatprep.subr.mxu0 0.0
    %1460 = vmatpush2.msra.mxu0 %v1335
    %1461 = vmatprep.subr.mxu0 0.0
    %1462 = vmatpush2.msra.mxu0 %v1334
    %1463 = vmatprep.subr.mxu0 0.0
    %1464 = vmatpush2.msra.mxu0 %v1333
    %1465 = vmatprep.subr.mxu0 0.0
    %1466 = vmatpush2.msra.mxu0 %v1332
    %1467 = vmatprep.subr.mxu0 0.0
    %1468 = vmatpush2.msra.mxu0 %v1331
    %1469 = vmatprep.subr.mxu0 0.0
    %1470 = vmatpush2.msra.mxu0 %v1330
    %1471 = vmatprep.mubr.f32.mxu0 %v1310
    %1472 = vmatmul.mubr.f32.gmra.mxu0 %v1309
    %v1473 = vpop.f32.mrf.mxu0
    %v1474 = vadd.f32 %v1398, %v1473
    %v1475 = vpop.f32.mrf.mxu0
    %1476 = vdwg.mxu0
    %1477 = vmatprep.subr.mxu0 0.0
    %1478 = vmatpush1.msra.mxu0 %v1361
    %1479 = vmatprep.subr.mxu0 0.0
    %1480 = vmatpush1.msra.mxu0 %v1360
    %1481 = vmatprep.subr.mxu0 0.0
    %1482 = vmatpush1.msra.mxu0 %v1359
    %1483 = vmatprep.subr.mxu0 0.0
    %1484 = vmatpush1.msra.mxu0 %v1358
    %1485 = vmatprep.subr.mxu0 0.0
    %1486 = vmatpush1.msra.mxu0 %v1357
    %1487 = vmatprep.subr.mxu0 0.0
    %1488 = vmatpush1.msra.mxu0 %v1356
    %1489 = vmatprep.subr.mxu0 0.0
    %1490 = vmatpush1.msra.mxu0 %v1355
    %1491 = vmatprep.subr.mxu0 0.0
    %1492 = vmatpush1.msra.mxu0 %v1354
    %1493 = vmatprep.subr.mxu0 0.0
    %1494 = vmatpush1.msra.mxu0 %v1353
    %1495 = vmatprep.subr.mxu0 0.0
    %1496 = vmatpush1.msra.mxu0 %v1352
    %1497 = vmatprep.subr.mxu0 0.0
    %1498 = vmatpush1.msra.mxu0 %v1351
    %1499 = vmatprep.subr.mxu0 0.0
    %1500 = vmatpush1.msra.mxu0 %v1350
    %1501 = vmatprep.subr.mxu0 0.0
    %1502 = vmatpush1.msra.mxu0 %v1349
    %1503 = vmatprep.subr.mxu0 0.0
    %1504 = vmatpush1.msra.mxu0 %v1348
    %1505 = vmatprep.subr.mxu0 0.0
    %1506 = vmatpush1.msra.mxu0 %v1347
    %1507 = vmatprep.subr.mxu0 0.0
    %1508 = vmatpush1.msra.mxu0 %v1346
    %1509 = vmatprep.subr.mxu0 0.0
    %1510 = vmatpush2.msra.mxu0 %v1377
    %1511 = vmatprep.subr.mxu0 0.0
    %1512 = vmatpush2.msra.mxu0 %v1376
    %1513 = vmatprep.subr.mxu0 0.0
    %1514 = vmatpush2.msra.mxu0 %v1375
    %1515 = vmatprep.subr.mxu0 0.0
    %1516 = vmatpush2.msra.mxu0 %v1374
    %1517 = vmatprep.subr.mxu0 0.0
    %1518 = vmatpush2.msra.mxu0 %v1373
    %1519 = vmatprep.subr.mxu0 0.0
    %1520 = vmatpush2.msra.mxu0 %v1372
    %1521 = vmatprep.subr.mxu0 0.0
    %1522 = vmatpush2.msra.mxu0 %v1371
    %1523 = vmatprep.subr.mxu0 0.0
    %1524 = vmatpush2.msra.mxu0 %v1370
    %1525 = vmatprep.subr.mxu0 0.0
    %1526 = vmatpush2.msra.mxu0 %v1369
    %1527 = vmatprep.subr.mxu0 0.0
    %1528 = vmatpush2.msra.mxu0 %v1368
    %1529 = vmatprep.subr.mxu0 0.0
    %1530 = vmatpush2.msra.mxu0 %v1367
    %1531 = vmatprep.subr.mxu0 0.0
    %1532 = vmatpush2.msra.mxu0 %v1366
    %1533 = vmatprep.subr.mxu0 0.0
    %1534 = vmatpush2.msra.mxu0 %v1365
    %1535 = vmatprep.subr.mxu0 0.0
    %1536 = vmatpush2.msra.mxu0 %v1364
    %1537 = vmatprep.subr.mxu0 0.0
    %1538 = vmatpush2.msra.mxu0 %v1363
    %1539 = vmatprep.subr.mxu0 0.0
    %1540 = vmatpush2.msra.mxu0 %v1362
    %1541 = vmatprep.mubr.f32.mxu0 %v1312
    %1542 = vmatmul.mubr.f32.gmra.mxu0 %v1311
    %v1543 = vpop.f32.mrf.mxu0
    %v1544 = vadd.f32 %v1474, %v1543
    %v1545 = vpop.f32.mrf.mxu0
    %1546 = vdwg.mxu0
    %1547 = vmatprep.subr.mxu0 0.0
    %1548 = vmatpush1.msra.mxu0 0.0
    %1549 = vmatprep.subr.mxu0 0.0
    %1550 = vmatpush1.msra.mxu0 %v1405
    %1551 = vmatprep.subr.mxu0 0.0
    %1552 = vmatpush1.msra.mxu0 %v1391
    %1553 = vmatprep.subr.mxu0 0.0
    %1554 = vmatpush1.msra.mxu0 %v1390
    %1555 = vmatprep.subr.mxu0 0.0
    %1556 = vmatpush1.msra.mxu0 %v1389
    %1557 = vmatprep.subr.mxu0 0.0
    %1558 = vmatpush1.msra.mxu0 %v1388
    %1559 = vmatprep.subr.mxu0 0.0
    %1560 = vmatpush1.msra.mxu0 %v1387
    %1561 = vmatprep.subr.mxu0 0.0
    %1562 = vmatpush1.msra.mxu0 %v1386
    %1563 = vmatprep.subr.mxu0 0.0
    %1564 = vmatpush1.msra.mxu0 %v1385
    %1565 = vmatprep.subr.mxu0 0.0
    %1566 = vmatpush1.msra.mxu0 %v1384
    %1567 = vmatprep.subr.mxu0 0.0
    %1568 = vmatpush1.msra.mxu0 %v1383
    %1569 = vmatprep.subr.mxu0 0.0
    %1570 = vmatpush1.msra.mxu0 %v1382
    %1571 = vmatprep.subr.mxu0 0.0
    %1572 = vmatpush1.msra.mxu0 %v1381
    %1573 = vmatprep.subr.mxu0 0.0
    %1574 = vmatpush1.msra.mxu0 %v1380
    %1575 = vmatprep.subr.mxu0 0.0
    %1576 = vmatpush1.msra.mxu0 %v1379
    %1577 = vmatprep.subr.mxu0 0.0
    %1578 = vmatpush1.msra.mxu0 %v1378
    %1579 = vmatprep.subr.mxu0 0.0
    %1580 = vmatpush2.msra.mxu0 0.0
    %1581 = vmatprep.subr.mxu0 0.0
    %1582 = vmatpush2.msra.mxu0 0.0
    %1583 = vmatprep.subr.mxu0 0.0
    %1584 = vmatpush2.msra.mxu0 0.0
    %1585 = vmatprep.subr.mxu0 0.0
    %1586 = vmatpush2.msra.mxu0 0.0
    %1587 = vmatprep.subr.mxu0 0.0
    %1588 = vmatpush2.msra.mxu0 0.0
    %1589 = vmatprep.subr.mxu0 0.0
    %1590 = vmatpush2.msra.mxu0 0.0
    %1591 = vmatprep.subr.mxu0 0.0
    %1592 = vmatpush2.msra.mxu0 0.0
    %1593 = vmatprep.subr.mxu0 0.0
    %1594 = vmatpush2.msra.mxu0 0.0
    %1595 = vmatprep.subr.mxu0 0.0
    %1596 = vmatpush2.msra.mxu0 0.0
    %1597 = vmatprep.subr.mxu0 0.0
    %1598 = vmatpush2.msra.mxu0 0.0
    %1599 = vmatprep.subr.mxu0 0.0
    %1600 = vmatpush2.msra.mxu0 0.0
    %1601 = vmatprep.subr.mxu0 0.0
    %1602 = vmatpush2.msra.mxu0 0.0
    %1603 = vmatprep.subr.mxu0 0.0
    %1604 = vmatpush2.msra.mxu0 0.0
    %1605 = vmatprep.subr.mxu0 0.0
    %1606 = vmatpush2.msra.mxu0 0.0
    %1607 = vmatprep.subr.mxu0 0.0
    %1608 = vmatpush2.msra.mxu0 0.0
    %1609 = vmatprep.subr.mxu0 0.0
    %1610 = vmatpush2.msra.mxu0 0.0
    %1611 = vmatprep.mubr.f32.mxu0 0.0
    %1612 = vmatmul.mubr.f32.gmra.mxu0 %v1402
    %v1613 = vpop.f32.mrf.mxu0
    %v1614 = vadd.f32 %v1544, %v1613
    %v1615 = vpop.f32.mrf.mxu0
    %1616 = vdwg.mxu0
    %1617 = vst [vmem:[#allocation5] sm:$0xff] %v1614
    // Predicated region
    $region50: #{tpu_custom_call.1} parent=1 // pred_check
      _
    $region51: #{tpu_custom_call.1} parent=1 // pred_check_branch
      %1619 = sbr.rel (0) target = $region53
    $region52: #{tpu_custom_call.1} parent=1 // pred_region
      %s1621 = ssub.s32 128, 128
      %1622 = vsyncadd [#allocation4], %s1621
      %s1624 = sshll.u32 [#allocation5], 4
      %s1625 = int_to_ptr.vmem [resolvable:$true] %s1624
      %1627 = dma.vmem_to_hbm [thread:$0]  %s1625, 128, %s11, [#allocation4]
    $region53: #{tpu_custom_call.1} parent=1 // pred_fallthru
      _
    // Predicated region
    $region54: #{tpu_custom_call.1} parent=1 // pred_check
      _
    $region55: #{tpu_custom_call.1} parent=1 // pred_check_branch
      %1629 = sbr.rel (0) target = $region57
    $region56: #{tpu_custom_call.1} parent=1 // pred_region
      %1630 = dma.done [#allocation4], 128
    $region57: #{tpu_custom_call.1} parent=1 // pred_fallthru
      _
    %1631 = vsyncpa [#allocation3], 1
    %1632 = vsyncpa [#allocation4], 1

</llo_original>
